<compile_context>
chip_gen: v6e
topology: v6e:2x2x1
jax: 0.10.0
libtpu: 0.0.40
codegen_flags: <defaults>
</compile_context>

<pallas_src>
import functools

import jax
import jax.numpy as jnp
from jax import lax
from jax.experimental import pallas as pl
from jax.experimental.pallas import tpu as pltpu


# ----------------------------- kernels -----------------------------

def _recurrent_kernel(emb_ref, feats_ref,
                      w_enc_ref, b_enc_ref,
                      w_dec_ref, b_dec_ref,
                      w_full_ref,
                      w_init_h_ref, b_init_h_ref,
                      w_init_c_ref, b_init_c_ref,
                      w_ih_x_ref, w_ih_ctx_ref, w_hh_ref, b_lstm_ref,
                      h_out_ref, *, approx_softmax):
    """One batch tile: init hidden state, then run the full T-step recurrence."""
    T = emb_ref.shape[0]
    feats = feats_ref[...]                                   # [TB, N, Ep] (weight dtype)
    TB, N, Ep = feats.shape
    Dp = w_init_h_ref.shape[1]
    cdt = feats.dtype                                        # matmul-operand dtype

    # ---- init_hidden_state: mean encoder feature via a ones-vector MXU matmul ----
    # (f32 accumulation without materializing an f32 copy of the feats block)
    ones_n = jnp.ones((TB, 1, N), cdt)
    sum_f = jnp.einsum('bqn,bne->bqe', ones_n, feats,
                       preferred_element_type=jnp.float32)[:, 0, :]       # [TB, Ep] f32
    mean_f = (sum_f * (1.0 / N)).astype(cdt)                              # [TB, Ep]
    h0 = (jnp.dot(mean_f, w_init_h_ref[...], preferred_element_type=jnp.float32)
          + b_init_h_ref[...])                               # [TB, Dp] f32
    c0 = (jnp.dot(mean_f, w_init_c_ref[...], preferred_element_type=jnp.float32)
          + b_init_c_ref[...])

    # ---- encoder_att(encoder_out): loop-invariant, computed once ----
    att1 = (jnp.dot(feats.reshape(TB * N, Ep), w_enc_ref[...],
                    preferred_element_type=jnp.float32)
            + b_enc_ref[...]).reshape(TB, N, -1)             # [TB, N, Ap] f32

    # Loop-invariant weight loads (hoisted out of the recurrence).
    w_dec = w_dec_ref[...]
    b_dec = b_dec_ref[...]
    w_full = w_full_ref[...]                                 # [1, Ap] f32
    w_ih_x = w_ih_x_ref[...]
    w_ih_ctx = w_ih_ctx_ref[...]
    w_hh = w_hh_ref[...]
    b_lstm = b_lstm_ref[...]

    def step(t, carry):
        h, c = carry                                         # f32 [TB, Dp]

        # ---- Bahdanau attention ----
        att2 = (jnp.dot(h.astype(cdt), w_dec, preferred_element_type=jnp.float32)
                + b_dec)                                     # [TB, Ap]
        att = jnp.maximum(att1 + att2[:, None, :], 0.0)      # [TB, N, Ap]
        # TODO(synk): if v5e profiling shows VPU/XLU saturation here, move this w_full
        #             contraction onto the MXU ([TB*N, Ap] @ [Ap, 128] with w_full in col 0).
        e = jnp.sum(att * w_full, axis=-1)                   # [TB, N]
        # (full_att.bias dropped: a uniform shift cancels in the softmax)
        e_max = jnp.max(e, axis=-1, keepdims=True)
        p = jnp.exp(e - e_max)
        denom = jnp.sum(p, axis=-1, keepdims=True)
        if approx_softmax:
            alpha = p * pl.reciprocal(denom, approx=True)
        else:
            alpha = p / denom
        # context[b, :] = sum_n alpha[b, n] * feats[b, n, :]  -- batched matmul (MXU)
        context = jnp.einsum('bqn,bne->bqe',
                             alpha[:, None, :].astype(cdt), feats,
                             preferred_element_type=jnp.float32)[:, 0, :]   # [TB, Ep]

        # ---- LSTMCell step (cat(emb, context) replaced by split weights) ----
        x_t = emb_ref[t]                                     # [TB, Emp]
        gates = (jnp.dot(x_t, w_ih_x, preferred_element_type=jnp.float32)
                 + jnp.dot(context.astype(cdt), w_ih_ctx,
                           preferred_element_type=jnp.float32)
                 + jnp.dot(h.astype(cdt), w_hh, preferred_element_type=jnp.float32)
                 + b_lstm)                                   # [TB, 4*Dp] f32
        i_g = jax.nn.sigmoid(gates[:, 0:Dp])
        f_g = jax.nn.sigmoid(gates[:, Dp:2 * Dp])
        g_g = jnp.tanh(gates[:, 2 * Dp:3 * Dp])
        o_g = jax.nn.sigmoid(gates[:, 3 * Dp:4 * Dp])
        c_new = f_g * c + i_g * g_g
        h_new = o_g * jnp.tanh(c_new)

        h_out_ref[t] = h_new.astype(h_out_ref.dtype)         # [TB, Dp] in weight dtype
        return (h_new, c_new)

    # No full unroll: each step materializes [TB, N, Ap]-sized intermediates.
    lax.fori_loop(0, T, step, (h0, c0))


def _fc_kernel(h_ref, w_ref, b_ref, o_ref):
    """Vocab projection for one (batch-tile, vocab-tile) grid point.

    h_ref: [T, TB, Dp] hidden states (weight dtype, time-major within the tile)
    w_ref: [Dp, tn]    fc weight tile,  b_ref: [1, tn] fc bias tile (f32)
    o_ref: [TB, T, tn] batch-major logits tile -> no host-side transpose needed.
    """
    w = w_ref[...]
    b = b_ref[...]
    T = h_ref.shape[0]
    # TODO(synk): merge a few timesteps into one matmul (M = k*TB) once the bf16
    #             (k, TB, Dp)->(k*TB, Dp) relayout is known-cheap; per-step matmuls
    #             keep every index static and lane-dense (>=512-wide stores).
    for t in range(T):
        logits = jnp.dot(h_ref[t], w, preferred_element_type=jnp.float32) + b
        o_ref[:, t, :] = logits.astype(o_ref.dtype)


# ----------------------------- host-side helpers -----------------------------

def _round_up(x, m):
    return (x + m - 1) // m * m


def _pad2d(x, rows, cols):
    return jnp.pad(x, ((0, rows - x.shape[0]), (0, cols - x.shape[1])))


def _pad_gate_cols(w, d, dp):
    """Pad the trailing [4*d] gate axis to [4*dp] per gate (keeps PyTorch i,f,g,o order)."""
    lead = w.shape[:-1]
    w4 = w.reshape(lead + (4, d))
    w4 = jnp.pad(w4, [(0, 0)] * len(lead) + [(0, 0), (0, dp - d)])
    return w4.reshape(lead + (4 * dp,))


def _auto_batch_tile(batch):
    """32-64 row batch tiles for MXU fill; >=2 tiles when possible (v7x megacore)."""
    bp = _round_up(batch, 8)
    if bp <= 8:
        return 8
    return min(64, _round_up((bp + 1) // 2, 8))


# ----------------------------- forward -----------------------------

def caption_decoder_forward(image_features, captions, params, *,
                            weight_dtype=jnp.bfloat16,
                            logits_dtype=jnp.float32,
                            batch_tile=None,
                            approx_softmax=True,
                            single_buffer_weights=True,
                            vmem_limit_bytes=56 * 1024 * 1024):
    """Replicates CaptionDecoder.forward. Returns predictions [B, seq_length, vocab_size].

    Per-generation tuning knobs:
      * batch_tile: raise toward 64 on v5e/v6e (raise vmem_limit_bytes to ~100 MiB);
        keep 16-32 on v7x (64 MiB physical VMEM).
      * logits_dtype=jnp.bfloat16 halves the FC writeback if downstream allows it.
    """
    B, N, E = image_features.shape
    L = captions.shape[1]
    T = L - 1
    emb_table = params["embedding"]                      # [V, Em]
    V, Em = emb_table.shape
    D = params["w_init_h"].shape[1]
    A = params["w_enc"].shape[1]

    TB = _auto_batch_tile(B) if batch_tile is None else batch_tile
    assert TB % 8 == 0
    Bp = _round_up(B, TB)

    # Lane-/sublane-aligned padded dims (zero padding is exact; see header comment).
    Ep, Ap, Dp, Emp = (_round_up(x, 128) for x in (E, A, D, Em))
    Vp = _round_up(V, 512)                               # >=512-wide FC vocab tiles
    f32 = jnp.float32
    wdt = weight_dtype

    # --- padded / split parameters (PyTorch layout -> kernel layout) ---
    w_enc = _pad2d(params["w_enc"], Ep, Ap).astype(wdt)
    b_enc = _pad2d(params["b_enc"], 1, Ap).astype(f32)
    w_dec = _pad2d(params["w_dec"], Dp, Ap).astype(wdt)
    b_dec = _pad2d(params["b_dec"], 1, Ap).astype(f32)
    w_full = _pad2d(params["w_full"], 1, Ap).astype(f32)
    # params["b_full"] is intentionally unused: a scalar added to every attention logit
    # cancels in the softmax, so dropping it preserves forward semantics exactly.
    w_init_h = _pad2d(params["w_init_h"], Ep, Dp).astype(wdt)
    b_init_h = _pad2d(params["b_init_h"], 1, Dp).astype(f32)
    w_init_c = _pad2d(params["w_init_c"], Ep, Dp).astype(wdt)
    b_init_c = _pad2d(params["b_init_c"], 1, Dp).astype(f32)
    w_ih_x = _pad2d(_pad_gate_cols(params["w_ih"][:Em], D, Dp), Emp, 4 * Dp).astype(wdt)
    w_ih_ctx = _pad2d(_pad_gate_cols(params["w_ih"][Em:], D, Dp), Ep, 4 * Dp).astype(wdt)
    w_hh = _pad2d(_pad_gate_cols(params["w_hh"], D, Dp), Dp, 4 * Dp).astype(wdt)
    b_lstm = _pad2d(_pad_gate_cols(params["b_lstm"], D, Dp), 1, 4 * Dp).astype(f32)
    w_fc = _pad2d(params["w_fc"], Dp, Vp).astype(wdt)
    b_fc = _pad2d(params["b_fc"], 1, Vp).astype(f32)

    # --- glue outside the kernels: embedding gather, time-major layout, padding ---
    emb = jnp.take(emb_table, captions[:, :T], axis=0)       # [B, T, Em]
    emb = jnp.transpose(emb, (1, 0, 2))                      # [T, B, Em]
    emb = jnp.pad(emb, ((0, 0), (0, Bp - B), (0, Emp - Em))).astype(wdt)
    feats = jnp.pad(image_features,
                    ((0, Bp - B), (0, 0), (0, Ep - E))).astype(wdt)

    # Constant-index weight blocks: single-buffered (index never changes -> the default
    # double-buffer only doubles resident VMEM, critical on v7x's 64 MiB).
    if single_buffer_weights:
        def wspec(shape):
            return pl.BlockSpec(shape, lambda b: (0,) * len(shape),
                                pipeline_mode=pl.Buffered(1))
    else:
        def wspec(shape):
            return pl.BlockSpec(shape, lambda b: (0,) * len(shape))

    # --- kernel 1: attention + LSTM recurrence, emits hidden states [T, Bp, Dp] (wdt) ---
    h_all = pl.pallas_call(
        functools.partial(_recurrent_kernel, approx_softmax=approx_softmax),
        out_shape=jax.ShapeDtypeStruct((T, Bp, Dp), wdt),
        grid=(Bp // TB,),
        in_specs=[
            pl.BlockSpec((T, TB, Emp), lambda b: (0, b, 0)),   # embedded captions
            pl.BlockSpec((TB, N, Ep), lambda b: (b, 0, 0)),    # image features
            wspec((Ep, Ap)), wspec((1, Ap)),                   # encoder_att
            wspec((Dp, Ap)), wspec((1, Ap)),                   # decoder_att
            wspec((1, Ap)),                                    # full_att weight
            wspec((Ep, Dp)), wspec((1, Dp)),                   # init_h
            wspec((Ep, Dp)), wspec((1, Dp)),                   # init_c
            wspec((Emp, 4 * Dp)),                              # lstm W_ih (embedding part)
            wspec((Ep, 4 * Dp)),                               # lstm W_ih (context part)
            wspec((Dp, 4 * Dp)), wspec((1, 4 * Dp)),           # lstm W_hh, b_ih + b_hh
        ],
        out_specs=pl.BlockSpec((T, TB, Dp), lambda b: (0, b, 0)),
        compiler_params=pltpu.CompilerParams(
            dimension_semantics=("parallel",),                 # batch tiles independent
            vmem_limit_bytes=vmem_limit_bytes),
    )(emb, feats,
      w_enc, b_enc, w_dec, b_dec, w_full,
      w_init_h, b_init_h, w_init_c, b_init_c,
      w_ih_x, w_ih_ctx, w_hh, b_lstm)

    # --- kernel 2: hoisted vocab projection, batch-major output (no host transpose) ---
    tn = 1024 if Vp % 1024 == 0 else 512                     # always >=512 lane-dense
    preds_full = pl.pallas_call(
        _fc_kernel,
        out_shape=jax.ShapeDtypeStruct((Bp, T, Vp), logits_dtype),
        grid=(Bp // TB, Vp // tn),
        in_specs=[
            pl.BlockSpec((T, TB, Dp), lambda b, j: (0, b, 0)),  # h (constant across j)
            pl.BlockSpec((Dp, tn), lambda b, j: (0, j)),        # fc weight tile
            pl.BlockSpec((1, tn), lambda b, j: (0, j)),         # fc bias tile
        ],
        out_specs=pl.BlockSpec((TB, T, tn), lambda b, j: (b, 0, j)),
        compiler_params=pltpu.CompilerParams(
            dimension_semantics=("parallel", "parallel"),
            vmem_limit_bytes=vmem_limit_bytes),
    )(h_all, w_fc, b_fc)

    return preds_full[:B, :, :V]                             # strip padding -> [B, T, V]


# ----------------------------- parameters & demo -----------------------------

def init_params(key, *, attention_dim, embed_dim, decoder_dim, vocab_size, encoder_dim):
    """Deterministic synthetic parameters (shapes match the PyTorch module, weights
    stored pre-transposed as [in_dim, out_dim] so the kernel computes x @ W)."""
    ks = jax.random.split(key, 16)
    u = lambda k, shape, s: jax.random.uniform(k, shape, jnp.float32, -s, s)
    A, Em, D, V, E = attention_dim, embed_dim, decoder_dim, vocab_size, encoder_dim
    return {
        "embedding": u(ks[0], (V, Em), 0.1),
        "w_enc": u(ks[1], (E, A), 1.0 / (E ** 0.5)),
        "b_enc": u(ks[2], (1, A), 1.0 / (E ** 0.5)),
        "w_dec": u(ks[3], (D, A), 1.0 / (D ** 0.5)),
        "b_dec": u(ks[4], (1, A), 1.0 / (D ** 0.5)),
        "w_full": u(ks[5], (1, A), 1.0 / (A ** 0.5)),
        "b_full": u(ks[6], (1, 1), 1.0 / (A ** 0.5)),   # redundant: cancels in softmax
        "w_init_h": u(ks[7], (E, D), 1.0 / (E ** 0.5)),
        "b_init_h": u(ks[8], (1, D), 1.0 / (E ** 0.5)),
        "w_init_c": u(ks[9], (E, D), 1.0 / (E ** 0.5)),
        "b_init_c": u(ks[10], (1, D), 1.0 / (E ** 0.5)),
        "w_ih": u(ks[11], (Em + E, 4 * D), 1.0 / (D ** 0.5)),
        "w_hh": u(ks[12], (D, 4 * D), 1.0 / (D ** 0.5)),
        "b_lstm": u(ks[13], (1, 4 * D), 1.0 / (D ** 0.5)),   # = b_ih + b_hh pre-summed
        "w_fc": u(ks[14], (D, V), 0.1),
        "b_fc": jnp.zeros((1, V), jnp.float32),
    }


if __name__ == "__main__":
    # Small shapes consistent with the module's forward.
    B, N = 2, 8                 # batch, number of encoder feature locations
    E = 32                      # encoder_dim
    D = 32                      # decoder_dim
    A = 16                      # attention_dim
    Em = 16                     # embed_dim
    V = 32                      # vocab_size
    L = 9                       # caption length -> seq_length = 8

    key = jax.random.PRNGKey(0)
    k_feat, k_cap, k_par = jax.random.split(key, 3)

    image_features = jax.random.normal(k_feat, (B, N, E), jnp.float32)
    captions = jax.random.randint(k_cap, (B, L), 0, V, jnp.int32)
    params = init_params(k_par, attention_dim=A, embed_dim=Em,
                         decoder_dim=D, vocab_size=V, encoder_dim=E)

    # Defaults: bf16 storage (f32 accumulation), auto batch tile, single-buffered
    # constant weight blocks, explicit VMEM limit.  Use weight_dtype=jnp.float32 /
    # approx_softmax=False for closest-to-PyTorch numerics.
    preds = caption_decoder_forward(image_features, captions, params)
    preds = jax.block_until_ready(preds)
    assert preds.shape == (B, L - 1, V), preds.shape
    assert jnp.all(jnp.isfinite(preds))
    print("KERNEL_OK")
</pallas_src>

<mosaic_0001>
module attributes {stable_mosaic.version = 11 : i64} {
  func.func @_recurrent_kernel(%arg0: i32, %arg1: memref<8x8x128xbf16, #tpu.memory_space<vmem>>, %arg2: memref<8x8x128xbf16, #tpu.memory_space<vmem>>, %arg3: memref<128x128xbf16, #tpu.memory_space<vmem>>, %arg4: memref<1x128xf32, #tpu.memory_space<vmem>>, %arg5: memref<128x128xbf16, #tpu.memory_space<vmem>>, %arg6: memref<1x128xf32, #tpu.memory_space<vmem>>, %arg7: memref<1x128xf32, #tpu.memory_space<vmem>>, %arg8: memref<128x128xbf16, #tpu.memory_space<vmem>>, %arg9: memref<1x128xf32, #tpu.memory_space<vmem>>, %arg10: memref<128x128xbf16, #tpu.memory_space<vmem>>, %arg11: memref<1x128xf32, #tpu.memory_space<vmem>>, %arg12: memref<128x512xbf16, #tpu.memory_space<vmem>>, %arg13: memref<128x512xbf16, #tpu.memory_space<vmem>>, %arg14: memref<128x512xbf16, #tpu.memory_space<vmem>>, %arg15: memref<1x512xf32, #tpu.memory_space<vmem>>, %arg16: memref<8x8x128xbf16, #tpu.memory_space<vmem>>) attributes {dimension_semantics = [#tpu.dimension_semantics<parallel>], iteration_bounds = array<i64: 1>, scalar_prefetch = 0 : i64, scratch_operands = 0 : i64, tpu.core_type = #tpu.core_type<tc>, window_params = [{transform_indices = @transform_0, window_bounds = array<i64: 8, 8, 128>}, {transform_indices = @transform_1, window_bounds = array<i64: 8, 8, 128>}, {pipeline_mode = #tpu.pipeline_mode<synchronous>, transform_indices = @transform_2, window_bounds = array<i64: 128, 128>}, {pipeline_mode = #tpu.pipeline_mode<synchronous>, transform_indices = @transform_3, window_bounds = array<i64: 1, 128>}, {pipeline_mode = #tpu.pipeline_mode<synchronous>, transform_indices = @transform_4, window_bounds = array<i64: 128, 128>}, {pipeline_mode = #tpu.pipeline_mode<synchronous>, transform_indices = @transform_5, window_bounds = array<i64: 1, 128>}, {pipeline_mode = #tpu.pipeline_mode<synchronous>, transform_indices = @transform_6, window_bounds = array<i64: 1, 128>}, {pipeline_mode = #tpu.pipeline_mode<synchronous>, transform_indices = @transform_7, window_bounds = array<i64: 128, 128>}, {pipeline_mode = #tpu.pipeline_mode<synchronous>, transform_indices = @transform_8, window_bounds = array<i64: 1, 128>}, {pipeline_mode = #tpu.pipeline_mode<synchronous>, transform_indices = @transform_9, window_bounds = array<i64: 128, 128>}, {pipeline_mode = #tpu.pipeline_mode<synchronous>, transform_indices = @transform_10, window_bounds = array<i64: 1, 128>}, {pipeline_mode = #tpu.pipeline_mode<synchronous>, transform_indices = @transform_11, window_bounds = array<i64: 128, 512>}, {pipeline_mode = #tpu.pipeline_mode<synchronous>, transform_indices = @transform_12, window_bounds = array<i64: 128, 512>}, {pipeline_mode = #tpu.pipeline_mode<synchronous>, transform_indices = @transform_13, window_bounds = array<i64: 128, 512>}, {pipeline_mode = #tpu.pipeline_mode<synchronous>, transform_indices = @transform_14, window_bounds = array<i64: 1, 512>}, {transform_indices = @transform_15, window_bounds = array<i64: 8, 8, 128>}]} {
    %c0 = arith.constant 0 : index
    %c0_0 = arith.constant 0 : index
    %c0_1 = arith.constant 0 : index
    %0 = vector.load %arg2[%c0, %c0_0, %c0_1] : memref<8x8x128xbf16, #tpu.memory_space<vmem>>, vector<8x8x128xbf16>
    %cst = arith.constant 1.000000e+00 : bf16
    %1 = vector.broadcast %cst : bf16 to vector<8x1x8xbf16>
    "tpu.trace_start"() <{level = 10 : i32, message = "bqn,bne->bqe"}> : () -> ()
    %cst_2 = arith.constant dense<0.000000e+00> : vector<8x1x128xf32>
    %2 = tpu.matmul %1, %0, %cst_2 {dimension_numbers = #tpu.dot_dimension_numbers<[2], [1], [1], [2], [0, 0, 0, 1, 1, 2], [0], [0]>} : vector<8x1x8xbf16>, vector<8x8x128xbf16>, vector<8x1x128xf32> -> vector<8x1x128xf32>
    "tpu.trace_stop"() : () -> ()
    %3 = vector.shape_cast %2 : vector<8x1x128xf32> to vector<8x128xf32>
    %cst_3 = arith.constant 1.250000e-01 : f32
    %4 = vector.broadcast %cst_3 : f32 to vector<8x128xf32>
    %5 = arith.mulf %3, %4 : vector<8x128xf32>
    %6 = arith.truncf %5 : vector<8x128xf32> to vector<8x128xbf16>
    %c0_4 = arith.constant 0 : index
    %c0_5 = arith.constant 0 : index
    %7 = vector.load %arg8[%c0_4, %c0_5] : memref<128x128xbf16, #tpu.memory_space<vmem>>, vector<128x128xbf16>
    %cst_6 = arith.constant dense<0.000000e+00> : vector<8x128xf32>
    %8 = tpu.matmul %6, %7, %cst_6 {dimension_numbers = #tpu.dot_dimension_numbers<[1], [0], [0], [1], [0, 0, 1, 1], [], []>} : vector<8x128xbf16>, vector<128x128xbf16>, vector<8x128xf32> -> vector<8x128xf32>
    %c0_7 = arith.constant 0 : index
    %c0_8 = arith.constant 0 : index
    %9 = vector.load %arg9[%c0_7, %c0_8] : memref<1x128xf32, #tpu.memory_space<vmem>>, vector<1x128xf32>
    %10 = vector.broadcast %9 : vector<1x128xf32> to vector<8x128xf32>
    %11 = arith.addf %8, %10 : vector<8x128xf32>
    %c0_9 = arith.constant 0 : index
    %c0_10 = arith.constant 0 : index
    %12 = vector.load %arg10[%c0_9, %c0_10] : memref<128x128xbf16, #tpu.memory_space<vmem>>, vector<128x128xbf16>
    %cst_11 = arith.constant dense<0.000000e+00> : vector<8x128xf32>
    %13 = tpu.matmul %6, %12, %cst_11 {dimension_numbers = #tpu.dot_dimension_numbers<[1], [0], [0], [1], [0, 0, 1, 1], [], []>} : vector<8x128xbf16>, vector<128x128xbf16>, vector<8x128xf32> -> vector<8x128xf32>
    %c0_12 = arith.constant 0 : index
    %c0_13 = arith.constant 0 : index
    %14 = vector.load %arg11[%c0_12, %c0_13] : memref<1x128xf32, #tpu.memory_space<vmem>>, vector<1x128xf32>
    %15 = vector.broadcast %14 : vector<1x128xf32> to vector<8x128xf32>
    %16 = arith.addf %13, %15 : vector<8x128xf32>
    %17 = vector.shape_cast %0 : vector<8x8x128xbf16> to vector<64x128xbf16>
    %c0_14 = arith.constant 0 : index
    %c0_15 = arith.constant 0 : index
    %18 = vector.load %arg3[%c0_14, %c0_15] : memref<128x128xbf16, #tpu.memory_space<vmem>>, vector<128x128xbf16>
    %cst_16 = arith.constant dense<0.000000e+00> : vector<64x128xf32>
    %19 = tpu.matmul %17, %18, %cst_16 {dimension_numbers = #tpu.dot_dimension_numbers<[1], [0], [0], [1], [0, 0, 1, 1], [], []>} : vector<64x128xbf16>, vector<128x128xbf16>, vector<64x128xf32> -> vector<64x128xf32>
    %c0_17 = arith.constant 0 : index
    %c0_18 = arith.constant 0 : index
    %20 = vector.load %arg4[%c0_17, %c0_18] : memref<1x128xf32, #tpu.memory_space<vmem>>, vector<1x128xf32>
    %21 = vector.broadcast %20 : vector<1x128xf32> to vector<64x128xf32>
    %22 = arith.addf %19, %21 : vector<64x128xf32>
    %23 = vector.shape_cast %22 : vector<64x128xf32> to vector<8x8x128xf32>
    %c0_19 = arith.constant 0 : index
    %c0_20 = arith.constant 0 : index
    %24 = vector.load %arg5[%c0_19, %c0_20] : memref<128x128xbf16, #tpu.memory_space<vmem>>, vector<128x128xbf16>
    %c0_21 = arith.constant 0 : index
    %c0_22 = arith.constant 0 : index
    %25 = vector.load %arg6[%c0_21, %c0_22] : memref<1x128xf32, #tpu.memory_space<vmem>>, vector<1x128xf32>
    %c0_23 = arith.constant 0 : index
    %c0_24 = arith.constant 0 : index
    %26 = vector.load %arg7[%c0_23, %c0_24] : memref<1x128xf32, #tpu.memory_space<vmem>>, vector<1x128xf32>
    %c0_25 = arith.constant 0 : index
    %c0_26 = arith.constant 0 : index
    %27 = vector.load %arg12[%c0_25, %c0_26] : memref<128x512xbf16, #tpu.memory_space<vmem>>, vector<128x512xbf16>
    %c0_27 = arith.constant 0 : index
    %c0_28 = arith.constant 0 : index
    %28 = vector.load %arg13[%c0_27, %c0_28] : memref<128x512xbf16, #tpu.memory_space<vmem>>, vector<128x512xbf16>
    %c0_29 = arith.constant 0 : index
    %c0_30 = arith.constant 0 : index
    %29 = vector.load %arg14[%c0_29, %c0_30] : memref<128x512xbf16, #tpu.memory_space<vmem>>, vector<128x512xbf16>
    %c0_31 = arith.constant 0 : index
    %c0_32 = arith.constant 0 : index
    %30 = vector.load %arg15[%c0_31, %c0_32] : memref<1x512xf32, #tpu.memory_space<vmem>>, vector<1x512xf32>
    %c0_i32 = arith.constant 0 : i32
    %c8_i32 = arith.constant 8 : i32
    %31 = arith.addi %c0_i32, %c8_i32 : i32
    %c1_i32 = arith.constant 1 : i32
    %32:2 = scf.for %arg17 = %c0_i32 to %31 step %c1_i32 iter_args(%arg18 = %11, %arg19 = %16) -> (vector<8x128xf32>, vector<8x128xf32>)  : i32 {
      %33 = arith.truncf %arg18 : vector<8x128xf32> to vector<8x128xbf16>
      %cst_34 = arith.constant dense<0.000000e+00> : vector<8x128xf32>
      %34 = tpu.matmul %33, %24, %cst_34 {dimension_numbers = #tpu.dot_dimension_numbers<[1], [0], [0], [1], [0, 0, 1, 1], [], []>} : vector<8x128xbf16>, vector<128x128xbf16>, vector<8x128xf32> -> vector<8x128xf32>
      %35 = vector.broadcast %25 : vector<1x128xf32> to vector<8x128xf32>
      %36 = arith.addf %34, %35 : vector<8x128xf32>
      %37 = vector.shape_cast %36 : vector<8x128xf32> to vector<8x1x128xf32>
      %38 = vector.broadcast %37 : vector<8x1x128xf32> to vector<8x8x128xf32>
      %39 = arith.addf %23, %38 : vector<8x8x128xf32>
      %cst_35 = arith.constant 0.000000e+00 : f32
      %40 = vector.broadcast %cst_35 : f32 to vector<8x8x128xf32>
      %41 = arith.maximumf %39, %40 : vector<8x8x128xf32>
      %42 = vector.shape_cast %26 : vector<1x128xf32> to vector<1x1x128xf32>
      %43 = vector.broadcast %42 : vector<1x1x128xf32> to vector<8x8x128xf32>
      %44 = arith.mulf %41, %43 : vector<8x8x128xf32>
      %cst_36 = arith.constant dense<0.000000e+00> : vector<8x8xf32>
      %45 = vector.multi_reduction <add>, %44, %cst_36 [2] : vector<8x8x128xf32> to vector<8x8xf32>
      %cst_37 = arith.constant dense<0xFF800000> : vector<8xf32>
      %46 = vector.multi_reduction <maximumf>, %45, %cst_37 [1] : vector<8x8xf32> to vector<8xf32>
      %47 = vector.shape_cast %46 : vector<8xf32> to vector<8x1xf32>
      %48 = vector.broadcast %47 : vector<8x1xf32> to vector<8x8xf32>
      %49 = arith.subf %45, %48 : vector<8x8xf32>
      %50 = math.exp %49 : vector<8x8xf32>
      %cst_38 = arith.constant dense<0.000000e+00> : vector<8xf32>
      %51 = vector.multi_reduction <add>, %50, %cst_38 [1] : vector<8x8xf32> to vector<8xf32>
      %52 = vector.shape_cast %51 : vector<8xf32> to vector<8x1xf32>
      %53 = tpu.reciprocal %52 {approx = true} : vector<8x1xf32> -> vector<8x1xf32>
      %54 = vector.broadcast %53 : vector<8x1xf32> to vector<8x8xf32>
      %55 = arith.mulf %50, %54 : vector<8x8xf32>
      %56 = vector.shape_cast %55 : vector<8x8xf32> to vector<8x1x8xf32>
      %57 = arith.truncf %56 : vector<8x1x8xf32> to vector<8x1x8xbf16>
      "tpu.trace_start"() <{level = 10 : i32, message = "bqn,bne->bqe"}> : () -> ()
      %cst_39 = arith.constant dense<0.000000e+00> : vector<8x1x128xf32>
      %58 = tpu.matmul %57, %0, %cst_39 {dimension_numbers = #tpu.dot_dimension_numbers<[2], [1], [1], [2], [0, 0, 0, 1, 1, 2], [0], [0]>} : vector<8x1x8xbf16>, vector<8x8x128xbf16>, vector<8x1x128xf32> -> vector<8x1x128xf32>
      "tpu.trace_stop"() : () -> ()
      %59 = vector.shape_cast %58 : vector<8x1x128xf32> to vector<8x128xf32>
      %60 = arith.index_cast %arg17 : i32 to index
      %c0_40 = arith.constant 0 : index
      %c0_41 = arith.constant 0 : index
      %61 = vector.load %arg1[%60, %c0_40, %c0_41] : memref<8x8x128xbf16, #tpu.memory_space<vmem>>, vector<1x8x128xbf16>
      %62 = vector.shape_cast %61 : vector<1x8x128xbf16> to vector<8x128xbf16>
      %cst_42 = arith.constant dense<0.000000e+00> : vector<8x512xf32>
      %63 = tpu.matmul %62, %27, %cst_42 {dimension_numbers = #tpu.dot_dimension_numbers<[1], [0], [0], [1], [0, 0, 1, 1], [], []>} : vector<8x128xbf16>, vector<128x512xbf16>, vector<8x512xf32> -> vector<8x512xf32>
      %64 = arith.truncf %59 : vector<8x128xf32> to vector<8x128xbf16>
      %cst_43 = arith.constant dense<0.000000e+00> : vector<8x512xf32>
      %65 = tpu.matmul %64, %28, %cst_43 {dimension_numbers = #tpu.dot_dimension_numbers<[1], [0], [0], [1], [0, 0, 1, 1], [], []>} : vector<8x128xbf16>, vector<128x512xbf16>, vector<8x512xf32> -> vector<8x512xf32>
      %66 = arith.addf %63, %65 : vector<8x512xf32>
      %67 = arith.truncf %arg18 : vector<8x128xf32> to vector<8x128xbf16>
      %cst_44 = arith.constant dense<0.000000e+00> : vector<8x512xf32>
      %68 = tpu.matmul %67, %29, %cst_44 {dimension_numbers = #tpu.dot_dimension_numbers<[1], [0], [0], [1], [0, 0, 1, 1], [], []>} : vector<8x128xbf16>, vector<128x512xbf16>, vector<8x512xf32> -> vector<8x512xf32>
      %69 = arith.addf %66, %68 : vector<8x512xf32>
      %70 = vector.broadcast %30 : vector<1x512xf32> to vector<8x512xf32>
      %71 = arith.addf %69, %70 : vector<8x512xf32>
      %72 = vector.extract_strided_slice %71 {offsets = [0, 0], sizes = [8, 128], strides = [1, 1]} : vector<8x512xf32> to vector<8x128xf32>
      %73 = arith.negf %72 : vector<8x128xf32>
      %74 = math.exp %73 : vector<8x128xf32>
      %cst_45 = arith.constant 1.000000e+00 : f32
      %75 = vector.broadcast %cst_45 : f32 to vector<8x128xf32>
      %76 = arith.addf %75, %74 : vector<8x128xf32>
      %77 = arith.divf %75, %76 : vector<8x128xf32>
      %78 = vector.extract_strided_slice %71 {offsets = [0, 128], sizes = [8, 128], strides = [1, 1]} : vector<8x512xf32> to vector<8x128xf32>
      %79 = arith.negf %78 : vector<8x128xf32>
      %80 = math.exp %79 : vector<8x128xf32>
      %cst_46 = arith.constant 1.000000e+00 : f32
      %81 = vector.broadcast %cst_46 : f32 to vector<8x128xf32>
      %82 = arith.addf %81, %80 : vector<8x128xf32>
      %83 = arith.divf %81, %82 : vector<8x128xf32>
      %84 = vector.extract_strided_slice %71 {offsets = [0, 256], sizes = [8, 128], strides = [1, 1]} : vector<8x512xf32> to vector<8x128xf32>
      %85 = math.tanh %84 : vector<8x128xf32>
      %86 = vector.extract_strided_slice %71 {offsets = [0, 384], sizes = [8, 128], strides = [1, 1]} : vector<8x512xf32> to vector<8x128xf32>
      %87 = arith.negf %86 : vector<8x128xf32>
      %88 = math.exp %87 : vector<8x128xf32>
      %cst_47 = arith.constant 1.000000e+00 : f32
      %89 = vector.broadcast %cst_47 : f32 to vector<8x128xf32>
      %90 = arith.addf %89, %88 : vector<8x128xf32>
      %91 = arith.divf %89, %90 : vector<8x128xf32>
      %92 = arith.mulf %83, %arg19 : vector<8x128xf32>
      %93 = arith.mulf %77, %85 : vector<8x128xf32>
      %94 = arith.addf %92, %93 : vector<8x128xf32>
      %95 = math.tanh %94 : vector<8x128xf32>
      %96 = arith.mulf %91, %95 : vector<8x128xf32>
      %97 = arith.truncf %96 : vector<8x128xf32> to vector<8x128xbf16>
      %98 = arith.index_cast %arg17 : i32 to index
      %c0_48 = arith.constant 0 : index
      %c0_49 = arith.constant 0 : index
      %99 = vector.load %arg16[%98, %c0_48, %c0_49] : memref<8x8x128xbf16, #tpu.memory_space<vmem>>, vector<1x8x128xbf16>
      %100 = vector.shape_cast %99 : vector<1x8x128xbf16> to vector<8x128xbf16>
      %101 = vector.shape_cast %97 : vector<8x128xbf16> to vector<1x8x128xbf16>
      tpu.vector_store %arg16[%98, %c0_48, %c0_49], %101 {strides = array<i32>} : memref<8x8x128xbf16, #tpu.memory_space<vmem>>, vector<1x8x128xbf16>,
      scf.yield %96, %94 : vector<8x128xf32>, vector<8x128xf32>
    }
    %c8_i32_33 = arith.constant 8 : i32
    return
  }
  func.func @transform_0(%arg0: i32) -> (i32, i32, i32) {
    %c0_i32 = arith.constant 0 : i32
    %c0_i32_0 = arith.constant 0 : i32
    %c0_i32_1 = arith.constant 0 : i32
    return %c0_i32, %arg0, %c0_i32_0 : i32, i32, i32
  }
  func.func @transform_1(%arg0: i32) -> (i32, i32, i32) {
    %c0_i32 = arith.constant 0 : i32
    %c0_i32_0 = arith.constant 0 : i32
    %c0_i32_1 = arith.constant 0 : i32
    return %arg0, %c0_i32, %c0_i32_0 : i32, i32, i32
  }
  func.func @transform_2(%arg0: i32) -> (i32, i32) {
    %c0_i32 = arith.constant 0 : i32
    %c0_i32_0 = arith.constant 0 : i32
    %c0_i32_1 = arith.constant 0 : i32
    return %c0_i32, %c0_i32_0 : i32, i32
  }
  func.func @transform_3(%arg0: i32) -> (i32, i32) {
    %c0_i32 = arith.constant 0 : i32
    %c0_i32_0 = arith.constant 0 : i32
    %c0_i32_1 = arith.constant 0 : i32
    return %c0_i32, %c0_i32_0 : i32, i32
  }
  func.func @transform_4(%arg0: i32) -> (i32, i32) {
    %c0_i32 = arith.constant 0 : i32
    %c0_i32_0 = arith.constant 0 : i32
    %c0_i32_1 = arith.constant 0 : i32
    return %c0_i32, %c0_i32_0 : i32, i32
  }
  func.func @transform_5(%arg0: i32) -> (i32, i32) {
    %c0_i32 = arith.constant 0 : i32
    %c0_i32_0 = arith.constant 0 : i32
    %c0_i32_1 = arith.constant 0 : i32
    return %c0_i32, %c0_i32_0 : i32, i32
  }
  func.func @transform_6(%arg0: i32) -> (i32, i32) {
    %c0_i32 = arith.constant 0 : i32
    %c0_i32_0 = arith.constant 0 : i32
    %c0_i32_1 = arith.constant 0 : i32
    return %c0_i32, %c0_i32_0 : i32, i32
  }
  func.func @transform_7(%arg0: i32) -> (i32, i32) {
    %c0_i32 = arith.constant 0 : i32
    %c0_i32_0 = arith.constant 0 : i32
    %c0_i32_1 = arith.constant 0 : i32
    return %c0_i32, %c0_i32_0 : i32, i32
  }
  func.func @transform_8(%arg0: i32) -> (i32, i32) {
    %c0_i32 = arith.constant 0 : i32
    %c0_i32_0 = arith.constant 0 : i32
    %c0_i32_1 = arith.constant 0 : i32
    return %c0_i32, %c0_i32_0 : i32, i32
  }
  func.func @transform_9(%arg0: i32) -> (i32, i32) {
    %c0_i32 = arith.constant 0 : i32
    %c0_i32_0 = arith.constant 0 : i32
    %c0_i32_1 = arith.constant 0 : i32
    return %c0_i32, %c0_i32_0 : i32, i32
  }
  func.func @transform_10(%arg0: i32) -> (i32, i32) {
    %c0_i32 = arith.constant 0 : i32
    %c0_i32_0 = arith.constant 0 : i32
    %c0_i32_1 = arith.constant 0 : i32
    return %c0_i32, %c0_i32_0 : i32, i32
  }
  func.func @transform_11(%arg0: i32) -> (i32, i32) {
    %c0_i32 = arith.constant 0 : i32
    %c0_i32_0 = arith.constant 0 : i32
    %c0_i32_1 = arith.constant 0 : i32
    return %c0_i32, %c0_i32_0 : i32, i32
  }
  func.func @transform_12(%arg0: i32) -> (i32, i32) {
    %c0_i32 = arith.constant 0 : i32
    %c0_i32_0 = arith.constant 0 : i32
    %c0_i32_1 = arith.constant 0 : i32
    return %c0_i32, %c0_i32_0 : i32, i32
  }
  func.func @transform_13(%arg0: i32) -> (i32, i32) {
    %c0_i32 = arith.constant 0 : i32
    %c0_i32_0 = arith.constant 0 : i32
    %c0_i32_1 = arith.constant 0 : i32
    return %c0_i32, %c0_i32_0 : i32, i32
  }
  func.func @transform_14(%arg0: i32) -> (i32, i32) {
    %c0_i32 = arith.constant 0 : i32
    %c0_i32_0 = arith.constant 0 : i32
    %c0_i32_1 = arith.constant 0 : i32
    return %c0_i32, %c0_i32_0 : i32, i32
  }
  func.func @transform_15(%arg0: i32) -> (i32, i32, i32) {
    %c0_i32 = arith.constant 0 : i32
    %c0_i32_0 = arith.constant 0 : i32
    %c0_i32_1 = arith.constant 0 : i32
    return %c0_i32, %arg0, %c0_i32_0 : i32, i32, i32
  }
}

</mosaic_0001>

<llo_original>
// kernel: tpu_custom_call.1
$region0: #{tpu_custom_call.1}
  #allocation0 [shape = 'u32[]', space=smem, size = 0x4, offset = 0x4, fixed_abs, tag = 'smem constant byte address 0x4 - core index']
  #allocation1 [shape = 'u32[144,128]{1,0:T(1,128)}', space=vmem, size = 0x12000, scoped, tag = 'internal scratch']
  %s0 = inlined_call_operand.hbm [shape: bf16[8,8,128], index: 0, kind: input, shape index: {}]
  %s1 = inlined_call_operand.hbm [shape: bf16[8,8,128], index: 1, kind: input, shape index: {}]
  %s2 = inlined_call_operand.hbm [shape: bf16[128,128], index: 2, kind: input, shape index: {}]
  %s3 = inlined_call_operand.vmem [shape: f32[1,128], index: 3, kind: input, shape index: {}]
  %s4 = inlined_call_operand.hbm [shape: bf16[128,128], index: 4, kind: input, shape index: {}]
  %s5 = inlined_call_operand.vmem [shape: f32[1,128], index: 5, kind: input, shape index: {}]
  %s6 = inlined_call_operand.vmem [shape: f32[1,128], index: 6, kind: input, shape index: {}]
  %s7 = inlined_call_operand.hbm [shape: bf16[128,128], index: 7, kind: input, shape index: {}]
  %s8 = inlined_call_operand.vmem [shape: f32[1,128], index: 8, kind: input, shape index: {}]
  %s9 = inlined_call_operand.hbm [shape: bf16[128,128], index: 9, kind: input, shape index: {}]
  %s10 = inlined_call_operand.vmem [shape: f32[1,128], index: 10, kind: input, shape index: {}]
  %s11 = inlined_call_operand.hbm [shape: bf16[128,512], index: 11, kind: input, shape index: {}]
  %s12 = inlined_call_operand.hbm [shape: bf16[128,512], index: 12, kind: input, shape index: {}]
  %s13 = inlined_call_operand.hbm [shape: bf16[128,512], index: 13, kind: input, shape index: {}]
  %s14 = inlined_call_operand.vmem [shape: f32[1,512], index: 14, kind: input, shape index: {}]
  %s15 = inlined_call_operand.hbm [shape: bf16[8,8,128], index: 15, kind: output, shape index: {}]
  %s16 = sld [smem:[#allocation0]]
  $region113: #{tpu_custom_call.1} parent=0
    _
  %s18 = ssub.s32 1, %s16
  %s19 = scalar_select 0, %s18, %s16
  $region1: #{tpu_custom_call.1} parent=0
    #allocation2 [shape = 'u8[16384]{0}', space=vmem, size = 0x4000, scoped, tag = 'input window, operand 0, single buffered']
    #allocation3 [shape = 's32[1]{0}', space=sflag, size = 0x4, scoped, tag = 'scoped memory for tpu_custom_call.1']
    #allocation4 [shape = 's32[1]{0}', space=sflag, size = 0x4, scoped, tag = 'scoped memory for tpu_custom_call.1']
    #allocation5 [shape = 'u8[16384]{0}', space=vmem, size = 0x4000, scoped, tag = 'input window, operand 1, single buffered']
    #allocation6 [shape = 's32[1]{0}', space=sflag, size = 0x4, scoped, tag = 'scoped memory for tpu_custom_call.1']
    #allocation7 [shape = 'u8[32768]{0}', space=vmem, size = 0x8000, scoped, tag = 'input window, operand 2, single buffered']
    #allocation8 [shape = 'u8[32768]{0}', space=vmem, size = 0x8000, scoped, tag = 'input window, operand 4, single buffered']
    #allocation9 [shape = 's32[1]{0}', space=sflag, size = 0x4, scoped, tag = 'scoped memory for tpu_custom_call.1']
    #allocation10 [shape = 'u8[32768]{0}', space=vmem, size = 0x8000, scoped, tag = 'input window, operand 7, single buffered']
    #allocation11 [shape = 'u8[32768]{0}', space=vmem, size = 0x8000, scoped, tag = 'input window, operand 9, single buffered']
    #allocation12 [shape = 's32[1]{0}', space=sflag, size = 0x4, scoped, tag = 'scoped memory for tpu_custom_call.1']
    #allocation13 [shape = 'u8[131072]{0}', space=vmem, size = 0x20000, scoped, tag = 'input window, operand 11, single buffered']
    #allocation14 [shape = 'u8[131072]{0}', space=vmem, size = 0x20000, scoped, tag = 'input window, operand 12, single buffered']
    #allocation15 [shape = 's32[1]{0}', space=sflag, size = 0x4, scoped, tag = 'scoped memory for tpu_custom_call.1']
    #allocation16 [shape = 'u8[131072]{0}', space=vmem, size = 0x20000, scoped, tag = 'input window, operand 13, single buffered']
    #allocation17 [shape = 'u8[16384]{0}', space=vmem, size = 0x4000, scoped, tag = 'output window, operand 0, single buffered']
    %20 = vsyncpa [#allocation3], 0
    %21 = vsyncpa [#allocation6], 0
    %22 = vsyncpa [#allocation9], 0
    %23 = vsyncpa [#allocation12], 0
    %24 = vsyncpa [#allocation15], 0
    %25 = vsyncpa [#allocation4], 0
    // Predicated region
    $region2: #{tpu_custom_call.1} parent=1 // pred_check
      _
    $region3: #{tpu_custom_call.1} parent=1 // pred_check_branch
      %27 = sbr.rel (0) target = $region5
    $region4: #{tpu_custom_call.1} parent=1 // pred_region
      %s29 = ssub.s32 512, 512
      %30 = vsyncadd [#allocation3], %s29
      %s31 = sshll.u32 [#allocation2], 4
      %s32 = int_to_ptr.vmem [resolvable:$true] %s31
      %37 = dma.hbm_to_vmem [thread:$0]  %s0, 512, %s32, [#allocation3], 64, 64, 4
    $region5: #{tpu_custom_call.1} parent=1 // pred_fallthru
      _
    // Predicated region
    $region6: #{tpu_custom_call.1} parent=1 // pred_check
      _
    $region7: #{tpu_custom_call.1} parent=1 // pred_check_branch
      %39 = sbr.rel (0) target = $region9
    $region8: #{tpu_custom_call.1} parent=1 // pred_region
      %s41 = ssub.s32 512, 512
      %42 = vsyncadd [#allocation6], %s41
      %s43 = sshll.u32 [#allocation5], 4
      %s44 = int_to_ptr.vmem [resolvable:$true] %s43
      %49 = dma.hbm_to_vmem [thread:$0]  %s1, 512, %s44, [#allocation6], 64, 64, 4
    $region9: #{tpu_custom_call.1} parent=1 // pred_fallthru
      _
    // Predicated region
    $region10: #{tpu_custom_call.1} parent=1 // pred_check
      _
    $region11: #{tpu_custom_call.1} parent=1 // pred_check_branch
      %51 = sbr.rel (0) target = $region13
    $region12: #{tpu_custom_call.1} parent=1 // pred_region
      %s53 = ssub.s32 1024, 1024
      %54 = vsyncadd [#allocation6], %s53
      %s55 = sshll.u32 [#allocation7], 4
      %s56 = int_to_ptr.vmem [resolvable:$true] %s55
      %61 = dma.hbm_to_vmem [thread:$0]  %s2, 1024, %s56, [#allocation6], 64, 64, 4
    $region13: #{tpu_custom_call.1} parent=1 // pred_fallthru
      _
    // Predicated region
    $region14: #{tpu_custom_call.1} parent=1 // pred_check
      _
    $region15: #{tpu_custom_call.1} parent=1 // pred_check_branch
      %63 = sbr.rel (0) target = $region17
    $region16: #{tpu_custom_call.1} parent=1 // pred_region
      _
    $region17: #{tpu_custom_call.1} parent=1 // pred_fallthru
      _
    // Predicated region
    $region18: #{tpu_custom_call.1} parent=1 // pred_check
      _
    $region19: #{tpu_custom_call.1} parent=1 // pred_check_branch
      %65 = sbr.rel (0) target = $region21
    $region20: #{tpu_custom_call.1} parent=1 // pred_region
      %s67 = ssub.s32 1024, 1024
      %68 = vsyncadd [#allocation9], %s67
      %s69 = sshll.u32 [#allocation8], 4
      %s70 = int_to_ptr.vmem [resolvable:$true] %s69
      %75 = dma.hbm_to_vmem [thread:$0]  %s4, 1024, %s70, [#allocation9], 64, 64, 4
    $region21: #{tpu_custom_call.1} parent=1 // pred_fallthru
      _
    // Predicated region
    $region22: #{tpu_custom_call.1} parent=1 // pred_check
      _
    $region23: #{tpu_custom_call.1} parent=1 // pred_check_branch
      %77 = sbr.rel (0) target = $region25
    $region24: #{tpu_custom_call.1} parent=1 // pred_region
      _
    $region25: #{tpu_custom_call.1} parent=1 // pred_fallthru
      _
    // Predicated region
    $region26: #{tpu_custom_call.1} parent=1 // pred_check
      _
    $region27: #{tpu_custom_call.1} parent=1 // pred_check_branch
      %79 = sbr.rel (0) target = $region29
    $region28: #{tpu_custom_call.1} parent=1 // pred_region
      _
    $region29: #{tpu_custom_call.1} parent=1 // pred_fallthru
      _
    // Predicated region
    $region30: #{tpu_custom_call.1} parent=1 // pred_check
      _
    $region31: #{tpu_custom_call.1} parent=1 // pred_check_branch
      %81 = sbr.rel (0) target = $region33
    $region32: #{tpu_custom_call.1} parent=1 // pred_region
      %s83 = ssub.s32 1024, 1024
      %84 = vsyncadd [#allocation9], %s83
      %s85 = sshll.u32 [#allocation10], 4
      %s86 = int_to_ptr.vmem [resolvable:$true] %s85
      %91 = dma.hbm_to_vmem [thread:$0]  %s7, 1024, %s86, [#allocation9], 64, 64, 4
    $region33: #{tpu_custom_call.1} parent=1 // pred_fallthru
      _
    // Predicated region
    $region34: #{tpu_custom_call.1} parent=1 // pred_check
      _
    $region35: #{tpu_custom_call.1} parent=1 // pred_check_branch
      %93 = sbr.rel (0) target = $region37
    $region36: #{tpu_custom_call.1} parent=1 // pred_region
      _
    $region37: #{tpu_custom_call.1} parent=1 // pred_fallthru
      _
    // Predicated region
    $region38: #{tpu_custom_call.1} parent=1 // pred_check
      _
    $region39: #{tpu_custom_call.1} parent=1 // pred_check_branch
      %95 = sbr.rel (0) target = $region41
    $region40: #{tpu_custom_call.1} parent=1 // pred_region
      %s97 = ssub.s32 1024, 1024
      %98 = vsyncadd [#allocation12], %s97
      %s99 = sshll.u32 [#allocation11], 4
      %s100 = int_to_ptr.vmem [resolvable:$true] %s99
      %105 = dma.hbm_to_vmem [thread:$0]  %s9, 1024, %s100, [#allocation12], 64, 64, 4
    $region41: #{tpu_custom_call.1} parent=1 // pred_fallthru
      _
    // Predicated region
    $region42: #{tpu_custom_call.1} parent=1 // pred_check
      _
    $region43: #{tpu_custom_call.1} parent=1 // pred_check_branch
      %107 = sbr.rel (0) target = $region45
    $region44: #{tpu_custom_call.1} parent=1 // pred_region
      _
    $region45: #{tpu_custom_call.1} parent=1 // pred_fallthru
      _
    // Predicated region
    $region46: #{tpu_custom_call.1} parent=1 // pred_check
      _
    $region47: #{tpu_custom_call.1} parent=1 // pred_check_branch
      %109 = sbr.rel (0) target = $region49
    $region48: #{tpu_custom_call.1} parent=1 // pred_region
      %s111 = ssub.s32 4096, 4096
      %112 = vsyncadd [#allocation12], %s111
      %s113 = sshll.u32 [#allocation13], 4
      %s114 = int_to_ptr.vmem [resolvable:$true] %s113
      %119 = dma.hbm_to_vmem [thread:$0]  %s11, 4096, %s114, [#allocation12], 256, 256, 16
    $region49: #{tpu_custom_call.1} parent=1 // pred_fallthru
      _
    // Predicated region
    $region50: #{tpu_custom_call.1} parent=1 // pred_check
      _
    $region51: #{tpu_custom_call.1} parent=1 // pred_check_branch
      %121 = sbr.rel (0) target = $region53
    $region52: #{tpu_custom_call.1} parent=1 // pred_region
      %s123 = ssub.s32 4096, 4096
      %124 = vsyncadd [#allocation15], %s123
      %s125 = sshll.u32 [#allocation14], 4
      %s126 = int_to_ptr.vmem [resolvable:$true] %s125
      %131 = dma.hbm_to_vmem [thread:$0]  %s12, 4096, %s126, [#allocation15], 256, 256, 16
    $region53: #{tpu_custom_call.1} parent=1 // pred_fallthru
      _
    // Predicated region
    $region54: #{tpu_custom_call.1} parent=1 // pred_check
      _
    $region55: #{tpu_custom_call.1} parent=1 // pred_check_branch
      %133 = sbr.rel (0) target = $region57
    $region56: #{tpu_custom_call.1} parent=1 // pred_region
      %s135 = ssub.s32 4096, 4096
      %136 = vsyncadd [#allocation15], %s135
      %s137 = sshll.u32 [#allocation16], 4
      %s138 = int_to_ptr.vmem [resolvable:$true] %s137
      %143 = dma.hbm_to_vmem [thread:$0]  %s13, 4096, %s138, [#allocation15], 256, 256, 16
    $region57: #{tpu_custom_call.1} parent=1 // pred_fallthru
      _
    // Predicated region
    $region58: #{tpu_custom_call.1} parent=1 // pred_check
      _
    $region59: #{tpu_custom_call.1} parent=1 // pred_check_branch
      %145 = sbr.rel (0) target = $region61
    $region60: #{tpu_custom_call.1} parent=1 // pred_region
      _
    $region61: #{tpu_custom_call.1} parent=1 // pred_fallthru
      _
    // Predicated region
    $region62: #{tpu_custom_call.1} parent=1 // pred_check
      _
    $region63: #{tpu_custom_call.1} parent=1 // pred_check_branch
      %147 = sbr.rel (0) target = $region65
    $region64: #{tpu_custom_call.1} parent=1 // pred_region
      %148 = dma.done [#allocation3], 512
    $region65: #{tpu_custom_call.1} parent=1 // pred_fallthru
      _
    // Predicated region
    $region66: #{tpu_custom_call.1} parent=1 // pred_check
      _
    $region67: #{tpu_custom_call.1} parent=1 // pred_check_branch
      %150 = sbr.rel (0) target = $region69
    $region68: #{tpu_custom_call.1} parent=1 // pred_region
      %151 = dma.done [#allocation6], 512
    $region69: #{tpu_custom_call.1} parent=1 // pred_fallthru
      _
    // Predicated region
    $region70: #{tpu_custom_call.1} parent=1 // pred_check
      _
    $region71: #{tpu_custom_call.1} parent=1 // pred_check_branch
      %153 = sbr.rel (0) target = $region73
    $region72: #{tpu_custom_call.1} parent=1 // pred_region
      %154 = dma.done [#allocation6], 1024
    $region73: #{tpu_custom_call.1} parent=1 // pred_fallthru
      _
    // Predicated region
    $region74: #{tpu_custom_call.1} parent=1 // pred_check
      _
    $region75: #{tpu_custom_call.1} parent=1 // pred_check_branch
      %156 = sbr.rel (0) target = $region77
    $region76: #{tpu_custom_call.1} parent=1 // pred_region
      %157 = dma.done [#allocation9], 1024
    $region77: #{tpu_custom_call.1} parent=1 // pred_fallthru
      _
    // Predicated region
    $region78: #{tpu_custom_call.1} parent=1 // pred_check
      _
    $region79: #{tpu_custom_call.1} parent=1 // pred_check_branch
      %159 = sbr.rel (0) target = $region81
    $region80: #{tpu_custom_call.1} parent=1 // pred_region
      %160 = dma.done [#allocation9], 1024
    $region81: #{tpu_custom_call.1} parent=1 // pred_fallthru
      _
    // Predicated region
    $region82: #{tpu_custom_call.1} parent=1 // pred_check
      _
    $region83: #{tpu_custom_call.1} parent=1 // pred_check_branch
      %162 = sbr.rel (0) target = $region85
    $region84: #{tpu_custom_call.1} parent=1 // pred_region
      %163 = dma.done [#allocation12], 1024
    $region85: #{tpu_custom_call.1} parent=1 // pred_fallthru
      _
    // Predicated region
    $region86: #{tpu_custom_call.1} parent=1 // pred_check
      _
    $region87: #{tpu_custom_call.1} parent=1 // pred_check_branch
      %165 = sbr.rel (0) target = $region89
    $region88: #{tpu_custom_call.1} parent=1 // pred_region
      %166 = dma.done [#allocation12], 4096
    $region89: #{tpu_custom_call.1} parent=1 // pred_fallthru
      _
    // Predicated region
    $region90: #{tpu_custom_call.1} parent=1 // pred_check
      _
    $region91: #{tpu_custom_call.1} parent=1 // pred_check_branch
      %168 = sbr.rel (0) target = $region93
    $region92: #{tpu_custom_call.1} parent=1 // pred_region
      %169 = dma.done [#allocation15], 4096
    $region93: #{tpu_custom_call.1} parent=1 // pred_fallthru
      _
    // Predicated region
    $region94: #{tpu_custom_call.1} parent=1 // pred_check
      _
    $region95: #{tpu_custom_call.1} parent=1 // pred_check_branch
      %171 = sbr.rel (0) target = $region97
    $region96: #{tpu_custom_call.1} parent=1 // pred_region
      %172 = dma.done [#allocation15], 4096
    $region97: #{tpu_custom_call.1} parent=1 // pred_fallthru
      _
    %v175 = vld [vmem:[#allocation5] sm:$0xf]
    %v176 = vld [vmem:[#allocation5 + $0x4] sm:$0xf]
    %v177 = vld [vmem:[#allocation5 + $0x8] sm:$0xf]
    %v178 = vld [vmem:[#allocation5 + $0xc] sm:$0xf]
    %v179 = vld [vmem:[#allocation5 + $0x10] sm:$0xf]
    %v180 = vld [vmem:[#allocation5 + $0x14] sm:$0xf]
    %v181 = vld [vmem:[#allocation5 + $0x18] sm:$0xf]
    %v182 = vld [vmem:[#allocation5 + $0x1c] sm:$0xf]
    %vm183 = vcmask 64512
    %v185 = vsel %vm183, 1065369472, 0
    %vm187 = vcmask 1043456
    %v189 = vsel %vm187, %v175, 0
    %191 = vmatprep.subr.bf16.mxu0 0
    %192 = vmatpush1.bf16.msra.mxu0 0
    %193 = vmatprep.subr.bf16.mxu0 0
    %194 = vmatpush1.bf16.msra.mxu0 0
    %195 = vmatprep.subr.bf16.mxu0 0
    %196 = vmatpush1.bf16.msra.mxu0 0
    %197 = vmatprep.subr.bf16.mxu0 0
    %198 = vmatpush1.bf16.msra.mxu0 0
    %199 = vmatprep.subr.bf16.mxu0 0
    %200 = vmatpush1.bf16.msra.mxu0 0
    %201 = vmatprep.subr.bf16.mxu0 0
    %202 = vmatpush1.bf16.msra.mxu0 0
    %203 = vmatprep.subr.bf16.mxu0 0
    %204 = vmatpush1.bf16.msra.mxu0 0
    %205 = vmatprep.subr.bf16.mxu0 0
    %206 = vmatpush1.bf16.msra.mxu0 %v189
    %207 = vmatprep.subr.bf16.mxu0 0
    %208 = vmatpush2.bf16.msra.mxu0 0
    %209 = vmatprep.subr.bf16.mxu0 0
    %210 = vmatpush2.bf16.msra.mxu0 0
    %211 = vmatprep.subr.bf16.mxu0 0
    %212 = vmatpush2.bf16.msra.mxu0 0
    %213 = vmatprep.subr.bf16.mxu0 0
    %214 = vmatpush2.bf16.msra.mxu0 0
    %215 = vmatprep.subr.bf16.mxu0 0
    %216 = vmatpush2.bf16.msra.mxu0 0
    %217 = vmatprep.subr.bf16.mxu0 0
    %218 = vmatpush2.bf16.msra.mxu0 0
    %219 = vmatprep.subr.bf16.mxu0 0
    %220 = vmatpush2.bf16.msra.mxu0 0
    %221 = vmatprep.subr.bf16.mxu0 0
    %222 = vmatpush2.bf16.msra.mxu0 0
    %223 = vmatprep.mubr.bf16.mxu0 0
    %224 = vmatmul.mubr.bf16.gmra.mxu0 %v185
    %v225 = vpop.f32.mrf.mxu0
    %v226 = vadd.f32 0.0, %v225
    %v227 = vpop.f32.mrf.mxu0
    %v228 = vpop.f32.mrf.mxu0
    %v229 = vpop.f32.mrf.mxu0
    %230 = vdwg.mxu0
    %v232 = vsel %vm187, %v176, 0
    %234 = vmatprep.subr.bf16.mxu0 0
    %235 = vmatpush1.bf16.msra.mxu0 0
    %236 = vmatprep.subr.bf16.mxu0 0
    %237 = vmatpush1.bf16.msra.mxu0 0
    %238 = vmatprep.subr.bf16.mxu0 0
    %239 = vmatpush1.bf16.msra.mxu0 0
    %240 = vmatprep.subr.bf16.mxu0 0
    %241 = vmatpush1.bf16.msra.mxu0 0
    %242 = vmatprep.subr.bf16.mxu0 0
    %243 = vmatpush1.bf16.msra.mxu0 0
    %244 = vmatprep.subr.bf16.mxu0 0
    %245 = vmatpush1.bf16.msra.mxu0 0
    %246 = vmatprep.subr.bf16.mxu0 0
    %247 = vmatpush1.bf16.msra.mxu0 0
    %248 = vmatprep.subr.bf16.mxu0 0
    %249 = vmatpush1.bf16.msra.mxu0 %v232
    %250 = vmatprep.subr.bf16.mxu0 0
    %251 = vmatpush2.bf16.msra.mxu0 0
    %252 = vmatprep.subr.bf16.mxu0 0
    %253 = vmatpush2.bf16.msra.mxu0 0
    %254 = vmatprep.subr.bf16.mxu0 0
    %255 = vmatpush2.bf16.msra.mxu0 0
    %256 = vmatprep.subr.bf16.mxu0 0
    %257 = vmatpush2.bf16.msra.mxu0 0
    %258 = vmatprep.subr.bf16.mxu0 0
    %259 = vmatpush2.bf16.msra.mxu0 0
    %260 = vmatprep.subr.bf16.mxu0 0
    %261 = vmatpush2.bf16.msra.mxu0 0
    %262 = vmatprep.subr.bf16.mxu0 0
    %263 = vmatpush2.bf16.msra.mxu0 0
    %264 = vmatprep.subr.bf16.mxu0 0
    %265 = vmatpush2.bf16.msra.mxu0 0
    %266 = vmatprep.mubr.bf16.mxu0 0
    %267 = vmatmul.mubr.bf16.gmra.mxu0 %v185
    %v268 = vpop.f32.mrf.mxu0
    %v269 = vadd.f32 0.0, %v268
    %v270 = vpop.f32.mrf.mxu0
    %v271 = vpop.f32.mrf.mxu0
    %v272 = vpop.f32.mrf.mxu0
    %273 = vdwg.mxu0
    %v275 = vsel %vm187, %v177, 0
    %277 = vmatprep.subr.bf16.mxu0 0
    %278 = vmatpush1.bf16.msra.mxu0 0
    %279 = vmatprep.subr.bf16.mxu0 0
    %280 = vmatpush1.bf16.msra.mxu0 0
    %281 = vmatprep.subr.bf16.mxu0 0
    %282 = vmatpush1.bf16.msra.mxu0 0
    %283 = vmatprep.subr.bf16.mxu0 0
    %284 = vmatpush1.bf16.msra.mxu0 0
    %285 = vmatprep.subr.bf16.mxu0 0
    %286 = vmatpush1.bf16.msra.mxu0 0
    %287 = vmatprep.subr.bf16.mxu0 0
    %288 = vmatpush1.bf16.msra.mxu0 0
    %289 = vmatprep.subr.bf16.mxu0 0
    %290 = vmatpush1.bf16.msra.mxu0 0
    %291 = vmatprep.subr.bf16.mxu0 0
    %292 = vmatpush1.bf16.msra.mxu0 %v275
    %293 = vmatprep.subr.bf16.mxu0 0
    %294 = vmatpush2.bf16.msra.mxu0 0
    %295 = vmatprep.subr.bf16.mxu0 0
    %296 = vmatpush2.bf16.msra.mxu0 0
    %297 = vmatprep.subr.bf16.mxu0 0
    %298 = vmatpush2.bf16.msra.mxu0 0
    %299 = vmatprep.subr.bf16.mxu0 0
    %300 = vmatpush2.bf16.msra.mxu0 0
    %301 = vmatprep.subr.bf16.mxu0 0
    %302 = vmatpush2.bf16.msra.mxu0 0
    %303 = vmatprep.subr.bf16.mxu0 0
    %304 = vmatpush2.bf16.msra.mxu0 0
    %305 = vmatprep.subr.bf16.mxu0 0
    %306 = vmatpush2.bf16.msra.mxu0 0
    %307 = vmatprep.subr.bf16.mxu0 0
    %308 = vmatpush2.bf16.msra.mxu0 0
    %309 = vmatprep.mubr.bf16.mxu0 0
    %310 = vmatmul.mubr.bf16.gmra.mxu0 %v185
    %v311 = vpop.f32.mrf.mxu0
    %v312 = vadd.f32 0.0, %v311
    %v313 = vpop.f32.mrf.mxu0
    %v314 = vpop.f32.mrf.mxu0
    %v315 = vpop.f32.mrf.mxu0
    %316 = vdwg.mxu0
    %v318 = vsel %vm187, %v178, 0
    %320 = vmatprep.subr.bf16.mxu0 0
    %321 = vmatpush1.bf16.msra.mxu0 0
    %322 = vmatprep.subr.bf16.mxu0 0
    %323 = vmatpush1.bf16.msra.mxu0 0
    %324 = vmatprep.subr.bf16.mxu0 0
    %325 = vmatpush1.bf16.msra.mxu0 0
    %326 = vmatprep.subr.bf16.mxu0 0
    %327 = vmatpush1.bf16.msra.mxu0 0
    %328 = vmatprep.subr.bf16.mxu0 0
    %329 = vmatpush1.bf16.msra.mxu0 0
    %330 = vmatprep.subr.bf16.mxu0 0
    %331 = vmatpush1.bf16.msra.mxu0 0
    %332 = vmatprep.subr.bf16.mxu0 0
    %333 = vmatpush1.bf16.msra.mxu0 0
    %334 = vmatprep.subr.bf16.mxu0 0
    %335 = vmatpush1.bf16.msra.mxu0 %v318
    %336 = vmatprep.subr.bf16.mxu0 0
    %337 = vmatpush2.bf16.msra.mxu0 0
    %338 = vmatprep.subr.bf16.mxu0 0
    %339 = vmatpush2.bf16.msra.mxu0 0
    %340 = vmatprep.subr.bf16.mxu0 0
    %341 = vmatpush2.bf16.msra.mxu0 0
    %342 = vmatprep.subr.bf16.mxu0 0
    %343 = vmatpush2.bf16.msra.mxu0 0
    %344 = vmatprep.subr.bf16.mxu0 0
    %345 = vmatpush2.bf16.msra.mxu0 0
    %346 = vmatprep.subr.bf16.mxu0 0
    %347 = vmatpush2.bf16.msra.mxu0 0
    %348 = vmatprep.subr.bf16.mxu0 0
    %349 = vmatpush2.bf16.msra.mxu0 0
    %350 = vmatprep.subr.bf16.mxu0 0
    %351 = vmatpush2.bf16.msra.mxu0 0
    %352 = vmatprep.mubr.bf16.mxu0 0
    %353 = vmatmul.mubr.bf16.gmra.mxu0 %v185
    %v354 = vpop.f32.mrf.mxu0
    %v355 = vadd.f32 0.0, %v354
    %v356 = vpop.f32.mrf.mxu0
    %v357 = vpop.f32.mrf.mxu0
    %v358 = vpop.f32.mrf.mxu0
    %359 = vdwg.mxu0
    %v361 = vsel %vm187, %v179, 0
    %363 = vmatprep.subr.bf16.mxu0 0
    %364 = vmatpush1.bf16.msra.mxu0 0
    %365 = vmatprep.subr.bf16.mxu0 0
    %366 = vmatpush1.bf16.msra.mxu0 0
    %367 = vmatprep.subr.bf16.mxu0 0
    %368 = vmatpush1.bf16.msra.mxu0 0
    %369 = vmatprep.subr.bf16.mxu0 0
    %370 = vmatpush1.bf16.msra.mxu0 0
    %371 = vmatprep.subr.bf16.mxu0 0
    %372 = vmatpush1.bf16.msra.mxu0 0
    %373 = vmatprep.subr.bf16.mxu0 0
    %374 = vmatpush1.bf16.msra.mxu0 0
    %375 = vmatprep.subr.bf16.mxu0 0
    %376 = vmatpush1.bf16.msra.mxu0 0
    %377 = vmatprep.subr.bf16.mxu0 0
    %378 = vmatpush1.bf16.msra.mxu0 %v361
    %379 = vmatprep.subr.bf16.mxu0 0
    %380 = vmatpush2.bf16.msra.mxu0 0
    %381 = vmatprep.subr.bf16.mxu0 0
    %382 = vmatpush2.bf16.msra.mxu0 0
    %383 = vmatprep.subr.bf16.mxu0 0
    %384 = vmatpush2.bf16.msra.mxu0 0
    %385 = vmatprep.subr.bf16.mxu0 0
    %386 = vmatpush2.bf16.msra.mxu0 0
    %387 = vmatprep.subr.bf16.mxu0 0
    %388 = vmatpush2.bf16.msra.mxu0 0
    %389 = vmatprep.subr.bf16.mxu0 0
    %390 = vmatpush2.bf16.msra.mxu0 0
    %391 = vmatprep.subr.bf16.mxu0 0
    %392 = vmatpush2.bf16.msra.mxu0 0
    %393 = vmatprep.subr.bf16.mxu0 0
    %394 = vmatpush2.bf16.msra.mxu0 0
    %395 = vmatprep.mubr.bf16.mxu0 0
    %396 = vmatmul.mubr.bf16.gmra.mxu0 %v185
    %v397 = vpop.f32.mrf.mxu0
    %v398 = vadd.f32 0.0, %v397
    %v399 = vpop.f32.mrf.mxu0
    %v400 = vpop.f32.mrf.mxu0
    %v401 = vpop.f32.mrf.mxu0
    %402 = vdwg.mxu0
    %v404 = vsel %vm187, %v180, 0
    %406 = vmatprep.subr.bf16.mxu0 0
    %407 = vmatpush1.bf16.msra.mxu0 0
    %408 = vmatprep.subr.bf16.mxu0 0
    %409 = vmatpush1.bf16.msra.mxu0 0
    %410 = vmatprep.subr.bf16.mxu0 0
    %411 = vmatpush1.bf16.msra.mxu0 0
    %412 = vmatprep.subr.bf16.mxu0 0
    %413 = vmatpush1.bf16.msra.mxu0 0
    %414 = vmatprep.subr.bf16.mxu0 0
    %415 = vmatpush1.bf16.msra.mxu0 0
    %416 = vmatprep.subr.bf16.mxu0 0
    %417 = vmatpush1.bf16.msra.mxu0 0
    %418 = vmatprep.subr.bf16.mxu0 0
    %419 = vmatpush1.bf16.msra.mxu0 0
    %420 = vmatprep.subr.bf16.mxu0 0
    %421 = vmatpush1.bf16.msra.mxu0 %v404
    %422 = vmatprep.subr.bf16.mxu0 0
    %423 = vmatpush2.bf16.msra.mxu0 0
    %424 = vmatprep.subr.bf16.mxu0 0
    %425 = vmatpush2.bf16.msra.mxu0 0
    %426 = vmatprep.subr.bf16.mxu0 0
    %427 = vmatpush2.bf16.msra.mxu0 0
    %428 = vmatprep.subr.bf16.mxu0 0
    %429 = vmatpush2.bf16.msra.mxu0 0
    %430 = vmatprep.subr.bf16.mxu0 0
    %431 = vmatpush2.bf16.msra.mxu0 0
    %432 = vmatprep.subr.bf16.mxu0 0
    %433 = vmatpush2.bf16.msra.mxu0 0
    %434 = vmatprep.subr.bf16.mxu0 0
    %435 = vmatpush2.bf16.msra.mxu0 0
    %436 = vmatprep.subr.bf16.mxu0 0
    %437 = vmatpush2.bf16.msra.mxu0 0
    %438 = vmatprep.mubr.bf16.mxu0 0
    %439 = vmatmul.mubr.bf16.gmra.mxu0 %v185
    %v440 = vpop.f32.mrf.mxu0
    %v441 = vadd.f32 0.0, %v440
    %v442 = vpop.f32.mrf.mxu0
    %v443 = vpop.f32.mrf.mxu0
    %v444 = vpop.f32.mrf.mxu0
    %445 = vdwg.mxu0
    %v447 = vsel %vm187, %v181, 0
    %449 = vmatprep.subr.bf16.mxu0 0
    %450 = vmatpush1.bf16.msra.mxu0 0
    %451 = vmatprep.subr.bf16.mxu0 0
    %452 = vmatpush1.bf16.msra.mxu0 0
    %453 = vmatprep.subr.bf16.mxu0 0
    %454 = vmatpush1.bf16.msra.mxu0 0
    %455 = vmatprep.subr.bf16.mxu0 0
    %456 = vmatpush1.bf16.msra.mxu0 0
    %457 = vmatprep.subr.bf16.mxu0 0
    %458 = vmatpush1.bf16.msra.mxu0 0
    %459 = vmatprep.subr.bf16.mxu0 0
    %460 = vmatpush1.bf16.msra.mxu0 0
    %461 = vmatprep.subr.bf16.mxu0 0
    %462 = vmatpush1.bf16.msra.mxu0 0
    %463 = vmatprep.subr.bf16.mxu0 0
    %464 = vmatpush1.bf16.msra.mxu0 %v447
    %465 = vmatprep.subr.bf16.mxu0 0
    %466 = vmatpush2.bf16.msra.mxu0 0
    %467 = vmatprep.subr.bf16.mxu0 0
    %468 = vmatpush2.bf16.msra.mxu0 0
    %469 = vmatprep.subr.bf16.mxu0 0
    %470 = vmatpush2.bf16.msra.mxu0 0
    %471 = vmatprep.subr.bf16.mxu0 0
    %472 = vmatpush2.bf16.msra.mxu0 0
    %473 = vmatprep.subr.bf16.mxu0 0
    %474 = vmatpush2.bf16.msra.mxu0 0
    %475 = vmatprep.subr.bf16.mxu0 0
    %476 = vmatpush2.bf16.msra.mxu0 0
    %477 = vmatprep.subr.bf16.mxu0 0
    %478 = vmatpush2.bf16.msra.mxu0 0
    %479 = vmatprep.subr.bf16.mxu0 0
    %480 = vmatpush2.bf16.msra.mxu0 0
    %481 = vmatprep.mubr.bf16.mxu0 0
    %482 = vmatmul.mubr.bf16.gmra.mxu0 %v185
    %v483 = vpop.f32.mrf.mxu0
    %v484 = vadd.f32 0.0, %v483
    %v485 = vpop.f32.mrf.mxu0
    %v486 = vpop.f32.mrf.mxu0
    %v487 = vpop.f32.mrf.mxu0
    %488 = vdwg.mxu0
    %v490 = vsel %vm187, %v182, 0
    %492 = vmatprep.subr.bf16.mxu0 0
    %493 = vmatpush1.bf16.msra.mxu0 0
    %494 = vmatprep.subr.bf16.mxu0 0
    %495 = vmatpush1.bf16.msra.mxu0 0
    %496 = vmatprep.subr.bf16.mxu0 0
    %497 = vmatpush1.bf16.msra.mxu0 0
    %498 = vmatprep.subr.bf16.mxu0 0
    %499 = vmatpush1.bf16.msra.mxu0 0
    %500 = vmatprep.subr.bf16.mxu0 0
    %501 = vmatpush1.bf16.msra.mxu0 0
    %502 = vmatprep.subr.bf16.mxu0 0
    %503 = vmatpush1.bf16.msra.mxu0 0
    %504 = vmatprep.subr.bf16.mxu0 0
    %505 = vmatpush1.bf16.msra.mxu0 0
    %506 = vmatprep.subr.bf16.mxu0 0
    %507 = vmatpush1.bf16.msra.mxu0 %v490
    %508 = vmatprep.subr.bf16.mxu0 0
    %509 = vmatpush2.bf16.msra.mxu0 0
    %510 = vmatprep.subr.bf16.mxu0 0
    %511 = vmatpush2.bf16.msra.mxu0 0
    %512 = vmatprep.subr.bf16.mxu0 0
    %513 = vmatpush2.bf16.msra.mxu0 0
    %514 = vmatprep.subr.bf16.mxu0 0
    %515 = vmatpush2.bf16.msra.mxu0 0
    %516 = vmatprep.subr.bf16.mxu0 0
    %517 = vmatpush2.bf16.msra.mxu0 0
    %518 = vmatprep.subr.bf16.mxu0 0
    %519 = vmatpush2.bf16.msra.mxu0 0
    %520 = vmatprep.subr.bf16.mxu0 0
    %521 = vmatpush2.bf16.msra.mxu0 0
    %522 = vmatprep.subr.bf16.mxu0 0
    %523 = vmatpush2.bf16.msra.mxu0 0
    %524 = vmatprep.mubr.bf16.mxu0 0
    %525 = vmatmul.mubr.bf16.gmra.mxu0 %v185
    %v526 = vpop.f32.mrf.mxu0
    %v527 = vadd.f32 0.0, %v526
    %v528 = vpop.f32.mrf.mxu0
    %v529 = vpop.f32.mrf.mxu0
    %v530 = vpop.f32.mrf.mxu0
    %531 = vdwg.mxu0
    %v532 = vmul.f32 %v226, 0.125
    %v533 = vmul.f32 %v269, 0.125
    %v534 = vmul.f32 %v312, 0.125
    %v535 = vmul.f32 %v355, 0.125
    %v536 = vmul.f32 %v398, 0.125
    %v537 = vmul.f32 %v441, 0.125
    %v538 = vmul.f32 %v484, 0.125
    %v539 = vmul.f32 %v527, 0.125
    %v540 = vpack.c.bf16 %v532, %v532
    %v541 = vpack.c.bf16 %v533, %v533
    %v542 = vpack.c.bf16 %v534, %v534
    %v543 = vpack.c.bf16 %v535, %v535
    %v544 = vpack.c.bf16 %v536, %v536
    %v545 = vpack.c.bf16 %v537, %v537
    %v546 = vpack.c.bf16 %v538, %v538
    %v547 = vpack.c.bf16 %v539, %v539
    %v548 = vld [vmem:[#allocation10] sm:$0xf]
    %v549 = vld [vmem:[#allocation10 + $0x4] sm:$0xf]
    %v550 = vld [vmem:[#allocation10 + $0x8] sm:$0xf]
    %v551 = vld [vmem:[#allocation10 + $0xc] sm:$0xf]
    %v552 = vld [vmem:[#allocation10 + $0x10] sm:$0xf]
    %v553 = vld [vmem:[#allocation10 + $0x14] sm:$0xf]
    %v554 = vld [vmem:[#allocation10 + $0x18] sm:$0xf]
    %v555 = vld [vmem:[#allocation10 + $0x1c] sm:$0xf]
    %v556 = vld [vmem:[#allocation10 + $0x20] sm:$0xf]
    %v557 = vld [vmem:[#allocation10 + $0x24] sm:$0xf]
    %v558 = vld [vmem:[#allocation10 + $0x28] sm:$0xf]
    %v559 = vld [vmem:[#allocation10 + $0x2c] sm:$0xf]
    %v560 = vld [vmem:[#allocation10 + $0x30] sm:$0xf]
    %v561 = vld [vmem:[#allocation10 + $0x34] sm:$0xf]
    %v562 = vld [vmem:[#allocation10 + $0x38] sm:$0xf]
    %v563 = vld [vmem:[#allocation10 + $0x3c] sm:$0xf]
    %v564 = vld [vmem:[%s8] sm:$0x1]
    %v566 = vlaneseq
    %v567 = vshrl.u32 %v566, 7
    %v568 = vsub.s32 0, %v567
    %v569 = vrot.slane %v564, %v568
    %v579 = vunpack.c.l.b16 %v540
    %v580 = vunpack.c.l.b16 %v541
    %v581 = vunpack.c.l.b16 %v542
    %v582 = vunpack.c.l.b16 %v543
    %v583 = vunpack.c.l.b16 %v544
    %v584 = vunpack.c.l.b16 %v545
    %v585 = vunpack.c.l.b16 %v546
    %v586 = vunpack.c.l.b16 %v547
    %v587 = vrot.slane %v580, 7
    %vm588 = vcmask 1041409
    %v589 = vsel %vm588, %v587, %v579
    %v590 = vrot.slane %v581, 6
    %vm591 = vcmask 1042434
    %v592 = vsel %vm591, %v590, %v589
    %v593 = vrot.slane %v582, 5
    %vm594 = vcmask 1043459
    %v595 = vsel %vm594, %v593, %v592
    %v596 = vrot.slane %v583, 4
    %vm597 = vcmask 1044484
    %v598 = vsel %vm597, %v596, %v595
    %v599 = vrot.slane %v584, 3
    %vm600 = vcmask 1045509
    %v601 = vsel %vm600, %v599, %v598
    %v602 = vrot.slane %v585, 2
    %vm603 = vcmask 1046534
    %v604 = vsel %vm603, %v602, %v601
    %v605 = vrot.slane %v586, 1
    %vm606 = vcmask 1047559
    %v607 = vsel %vm606, %v605, %v604
    %v608 = vpack.c.b16 %v607, %v607
    %v626 = vunpack.c.l.b16 %v548
    %v627 = vunpack.c.l.b16 %v549
    %v628 = vunpack.c.l.b16 %v550
    %v629 = vunpack.c.l.b16 %v551
    %v630 = vunpack.c.l.b16 %v552
    %v631 = vunpack.c.l.b16 %v553
    %v632 = vunpack.c.l.b16 %v554
    %v633 = vunpack.c.l.b16 %v555
    %v634 = vunpack.c.l.b16 %v556
    %v635 = vunpack.c.l.b16 %v557
    %v636 = vunpack.c.l.b16 %v558
    %v637 = vunpack.c.l.b16 %v559
    %v638 = vunpack.c.l.b16 %v560
    %v639 = vunpack.c.l.b16 %v561
    %v640 = vunpack.c.l.b16 %v562
    %v641 = vunpack.c.l.b16 %v563
    %v642 = vpack.c.b16 %v627, %v626
    %v643 = vpack.c.b16 %v629, %v628
    %v644 = vpack.c.b16 %v631, %v630
    %v645 = vpack.c.b16 %v633, %v632
    %v646 = vpack.c.b16 %v635, %v634
    %v647 = vpack.c.b16 %v637, %v636
    %v648 = vpack.c.b16 %v639, %v638
    %v649 = vpack.c.b16 %v641, %v640
    %658 = vmatprep.subr.bf16.mxu0 0
    %659 = vmatpush1.bf16.msra.mxu0 %v649
    %660 = vmatprep.subr.bf16.mxu0 0
    %661 = vmatpush1.bf16.msra.mxu0 %v648
    %662 = vmatprep.subr.bf16.mxu0 0
    %663 = vmatpush1.bf16.msra.mxu0 %v647
    %664 = vmatprep.subr.bf16.mxu0 0
    %665 = vmatpush1.bf16.msra.mxu0 %v646
    %666 = vmatprep.subr.bf16.mxu0 0
    %667 = vmatpush1.bf16.msra.mxu0 %v645
    %668 = vmatprep.subr.bf16.mxu0 0
    %669 = vmatpush1.bf16.msra.mxu0 %v644
    %670 = vmatprep.subr.bf16.mxu0 0
    %671 = vmatpush1.bf16.msra.mxu0 %v643
    %672 = vmatprep.subr.bf16.mxu0 0
    %673 = vmatpush1.bf16.msra.mxu0 %v642
    %674 = vmatprep.subr.bf16.mxu0 0
    %675 = vmatpush2.bf16.msra.mxu0 0
    %676 = vmatprep.subr.bf16.mxu0 0
    %677 = vmatpush2.bf16.msra.mxu0 0
    %678 = vmatprep.subr.bf16.mxu0 0
    %679 = vmatpush2.bf16.msra.mxu0 0
    %680 = vmatprep.subr.bf16.mxu0 0
    %681 = vmatpush2.bf16.msra.mxu0 0
    %682 = vmatprep.subr.bf16.mxu0 0
    %683 = vmatpush2.bf16.msra.mxu0 0
    %684 = vmatprep.subr.bf16.mxu0 0
    %685 = vmatpush2.bf16.msra.mxu0 0
    %686 = vmatprep.subr.bf16.mxu0 0
    %687 = vmatpush2.bf16.msra.mxu0 0
    %688 = vmatprep.subr.bf16.mxu0 0
    %689 = vmatpush2.bf16.msra.mxu0 0
    %690 = vmatprep.mubr.bf16.mxu0 0
    %691 = vmatmul.mubr.bf16.gmra.mxu0 %v608
    %v692 = vpop.f32.mrf.mxu0
    %v693 = vadd.f32 %v569, %v692
    %v694 = vpop.f32.mrf.mxu0
    %v695 = vpop.f32.mrf.mxu0
    %v696 = vpop.f32.mrf.mxu0
    %697 = vdwg.mxu0
    %v698 = vld [vmem:[#allocation11] sm:$0xf]
    %v699 = vld [vmem:[#allocation11 + $0x4] sm:$0xf]
    %v700 = vld [vmem:[#allocation11 + $0x8] sm:$0xf]
    %v701 = vld [vmem:[#allocation11 + $0xc] sm:$0xf]
    %v702 = vld [vmem:[#allocation11 + $0x10] sm:$0xf]
    %v703 = vld [vmem:[#allocation11 + $0x14] sm:$0xf]
    %v704 = vld [vmem:[#allocation11 + $0x18] sm:$0xf]
    %v705 = vld [vmem:[#allocation11 + $0x1c] sm:$0xf]
    %v706 = vld [vmem:[#allocation11 + $0x20] sm:$0xf]
    %v707 = vld [vmem:[#allocation11 + $0x24] sm:$0xf]
    %v708 = vld [vmem:[#allocation11 + $0x28] sm:$0xf]
    %v709 = vld [vmem:[#allocation11 + $0x2c] sm:$0xf]
    %v710 = vld [vmem:[#allocation11 + $0x30] sm:$0xf]
    %v711 = vld [vmem:[#allocation11 + $0x34] sm:$0xf]
    %v712 = vld [vmem:[#allocation11 + $0x38] sm:$0xf]
    %v713 = vld [vmem:[#allocation11 + $0x3c] sm:$0xf]
    %v714 = vld [vmem:[%s10] sm:$0x1]
    %v716 = vlaneseq
    %v717 = vshrl.u32 %v716, 7
    %v718 = vsub.s32 0, %v717
    %v719 = vrot.slane %v714, %v718
    %v737 = vunpack.c.l.b16 %v698
    %v738 = vunpack.c.l.b16 %v699
    %v739 = vunpack.c.l.b16 %v700
    %v740 = vunpack.c.l.b16 %v701
    %v741 = vunpack.c.l.b16 %v702
    %v742 = vunpack.c.l.b16 %v703
    %v743 = vunpack.c.l.b16 %v704
    %v744 = vunpack.c.l.b16 %v705
    %v745 = vunpack.c.l.b16 %v706
    %v746 = vunpack.c.l.b16 %v707
    %v747 = vunpack.c.l.b16 %v708
    %v748 = vunpack.c.l.b16 %v709
    %v749 = vunpack.c.l.b16 %v710
    %v750 = vunpack.c.l.b16 %v711
    %v751 = vunpack.c.l.b16 %v712
    %v752 = vunpack.c.l.b16 %v713
    %v753 = vpack.c.b16 %v738, %v737
    %v754 = vpack.c.b16 %v740, %v739
    %v755 = vpack.c.b16 %v742, %v741
    %v756 = vpack.c.b16 %v744, %v743
    %v757 = vpack.c.b16 %v746, %v745
    %v758 = vpack.c.b16 %v748, %v747
    %v759 = vpack.c.b16 %v750, %v749
    %v760 = vpack.c.b16 %v752, %v751
    %769 = vmatprep.subr.bf16.mxu0 0
    %770 = vmatpush1.bf16.msra.mxu0 %v760
    %771 = vmatprep.subr.bf16.mxu0 0
    %772 = vmatpush1.bf16.msra.mxu0 %v759
    %773 = vmatprep.subr.bf16.mxu0 0
    %774 = vmatpush1.bf16.msra.mxu0 %v758
    %775 = vmatprep.subr.bf16.mxu0 0
    %776 = vmatpush1.bf16.msra.mxu0 %v757
    %777 = vmatprep.subr.bf16.mxu0 0
    %778 = vmatpush1.bf16.msra.mxu0 %v756
    %779 = vmatprep.subr.bf16.mxu0 0
    %780 = vmatpush1.bf16.msra.mxu0 %v755
    %781 = vmatprep.subr.bf16.mxu0 0
    %782 = vmatpush1.bf16.msra.mxu0 %v754
    %783 = vmatprep.subr.bf16.mxu0 0
    %784 = vmatpush1.bf16.msra.mxu0 %v753
    %785 = vmatprep.subr.bf16.mxu0 0
    %786 = vmatpush2.bf16.msra.mxu0 0
    %787 = vmatprep.subr.bf16.mxu0 0
    %788 = vmatpush2.bf16.msra.mxu0 0
    %789 = vmatprep.subr.bf16.mxu0 0
    %790 = vmatpush2.bf16.msra.mxu0 0
    %791 = vmatprep.subr.bf16.mxu0 0
    %792 = vmatpush2.bf16.msra.mxu0 0
    %793 = vmatprep.subr.bf16.mxu0 0
    %794 = vmatpush2.bf16.msra.mxu0 0
    %795 = vmatprep.subr.bf16.mxu0 0
    %796 = vmatpush2.bf16.msra.mxu0 0
    %797 = vmatprep.subr.bf16.mxu0 0
    %798 = vmatpush2.bf16.msra.mxu0 0
    %799 = vmatprep.subr.bf16.mxu0 0
    %800 = vmatpush2.bf16.msra.mxu0 0
    %801 = vmatprep.mubr.bf16.mxu0 0
    %802 = vmatmul.mubr.bf16.gmra.mxu0 %v608
    %v803 = vpop.f32.mrf.mxu0
    %v804 = vadd.f32 %v719, %v803
    %v805 = vpop.f32.mrf.mxu0
    %v806 = vpop.f32.mrf.mxu0
    %v807 = vpop.f32.mrf.mxu0
    %808 = vdwg.mxu0
    %v809 = vld [vmem:[#allocation7] sm:$0xf]
    %v810 = vld [vmem:[#allocation7 + $0x4] sm:$0xf]
    %v811 = vld [vmem:[#allocation7 + $0x8] sm:$0xf]
    %v812 = vld [vmem:[#allocation7 + $0xc] sm:$0xf]
    %v813 = vld [vmem:[#allocation7 + $0x10] sm:$0xf]
    %v814 = vld [vmem:[#allocation7 + $0x14] sm:$0xf]
    %v815 = vld [vmem:[#allocation7 + $0x18] sm:$0xf]
    %v816 = vld [vmem:[#allocation7 + $0x1c] sm:$0xf]
    %v817 = vld [vmem:[#allocation7 + $0x20] sm:$0xf]
    %v818 = vld [vmem:[#allocation7 + $0x24] sm:$0xf]
    %v819 = vld [vmem:[#allocation7 + $0x28] sm:$0xf]
    %v820 = vld [vmem:[#allocation7 + $0x2c] sm:$0xf]
    %v821 = vld [vmem:[#allocation7 + $0x30] sm:$0xf]
    %v822 = vld [vmem:[#allocation7 + $0x34] sm:$0xf]
    %v823 = vld [vmem:[#allocation7 + $0x38] sm:$0xf]
    %v824 = vld [vmem:[#allocation7 + $0x3c] sm:$0xf]
    %v825 = vld [vmem:[%s3] sm:$0x1]
    %v827 = vlaneseq
    %v828 = vshrl.u32 %v827, 7
    %v829 = vsub.s32 0, %v828
    %v830 = vrot.slane %v825, %v829
    %v840 = vunpack.c.l.b16 %v175
    %v841 = vunpack.c.l.b16 %v176
    %v842 = vunpack.c.l.b16 %v177
    %v843 = vunpack.c.l.b16 %v178
    %v844 = vunpack.c.l.b16 %v179
    %v845 = vunpack.c.l.b16 %v180
    %v846 = vunpack.c.l.b16 %v181
    %v847 = vunpack.c.l.b16 %v182
    %v848 = vpack.c.b16 %v841, %v840
    %v849 = vpack.c.b16 %v843, %v842
    %v850 = vpack.c.b16 %v845, %v844
    %v851 = vpack.c.b16 %v847, %v846
    %v872 = vunpack.c.l.b16 %v809
    %v873 = vunpack.c.l.b16 %v810
    %v874 = vunpack.c.l.b16 %v811
    %v875 = vunpack.c.l.b16 %v812
    %v876 = vunpack.c.l.b16 %v813
    %v877 = vunpack.c.l.b16 %v814
    %v878 = vunpack.c.l.b16 %v815
    %v879 = vunpack.c.l.b16 %v816
    %v880 = vunpack.c.l.b16 %v817
    %v881 = vunpack.c.l.b16 %v818
    %v882 = vunpack.c.l.b16 %v819
    %v883 = vunpack.c.l.b16 %v820
    %v884 = vunpack.c.l.b16 %v821
    %v885 = vunpack.c.l.b16 %v822
    %v886 = vunpack.c.l.b16 %v823
    %v887 = vunpack.c.l.b16 %v824
    %v888 = vpack.c.b16 %v873, %v872
    %v889 = vpack.c.b16 %v875, %v874
    %v890 = vpack.c.b16 %v877, %v876
    %v891 = vpack.c.b16 %v879, %v878
    %v892 = vpack.c.b16 %v881, %v880
    %v893 = vpack.c.b16 %v883, %v882
    %v894 = vpack.c.b16 %v885, %v884
    %v895 = vpack.c.b16 %v887, %v886
    %904 = vmatprep.subr.bf16.mxu0 0
    %905 = vmatpush1.bf16.msra.mxu0 %v895
    %906 = vmatprep.subr.bf16.mxu0 0
    %907 = vmatpush1.bf16.msra.mxu0 %v894
    %908 = vmatprep.subr.bf16.mxu0 0
    %909 = vmatpush1.bf16.msra.mxu0 %v893
    %910 = vmatprep.subr.bf16.mxu0 0
    %911 = vmatpush1.bf16.msra.mxu0 %v892
    %912 = vmatprep.subr.bf16.mxu0 0
    %913 = vmatpush1.bf16.msra.mxu0 %v891
    %914 = vmatprep.subr.bf16.mxu0 0
    %915 = vmatpush1.bf16.msra.mxu0 %v890
    %916 = vmatprep.subr.bf16.mxu0 0
    %917 = vmatpush1.bf16.msra.mxu0 %v889
    %918 = vmatprep.subr.bf16.mxu0 0
    %919 = vmatpush1.bf16.msra.mxu0 %v888
    %920 = vmatprep.subr.bf16.mxu0 0
    %921 = vmatpush2.bf16.msra.mxu0 0
    %922 = vmatprep.subr.bf16.mxu0 0
    %923 = vmatpush2.bf16.msra.mxu0 0
    %924 = vmatprep.subr.bf16.mxu0 0
    %925 = vmatpush2.bf16.msra.mxu0 0
    %926 = vmatprep.subr.bf16.mxu0 0
    %927 = vmatpush2.bf16.msra.mxu0 0
    %928 = vmatprep.subr.bf16.mxu0 0
    %929 = vmatpush2.bf16.msra.mxu0 0
    %930 = vmatprep.subr.bf16.mxu0 0
    %931 = vmatpush2.bf16.msra.mxu0 0
    %932 = vmatprep.subr.bf16.mxu0 0
    %933 = vmatpush2.bf16.msra.mxu0 0
    %934 = vmatprep.subr.bf16.mxu0 0
    %935 = vmatpush2.bf16.msra.mxu0 0
    %936 = vmatprep.mubr.bf16.mxu0 0
    %937 = vmatmul.mubr.bf16.gmra.mxu0 %v848
    %v938 = vpop.f32.mrf.mxu0
    %v939 = vadd.f32 %v830, %v938
    %v940 = vpop.f32.mrf.mxu0
    %v941 = vpop.f32.mrf.mxu0
    %v942 = vadd.f32 %v830, %v941
    %v943 = vpop.f32.mrf.mxu0
    %944 = vmatprep.mubr.bf16.mxu0 0
    %945 = vmatmul.mubr.bf16.gmra.mxu0 %v849
    %v946 = vpop.f32.mrf.mxu0
    %v947 = vadd.f32 %v830, %v946
    %v948 = vpop.f32.mrf.mxu0
    %v949 = vpop.f32.mrf.mxu0
    %v950 = vadd.f32 %v830, %v949
    %v951 = vpop.f32.mrf.mxu0
    %952 = vmatprep.mubr.bf16.mxu0 0
    %953 = vmatmul.mubr.bf16.gmra.mxu0 %v850
    %v954 = vpop.f32.mrf.mxu0
    %v955 = vadd.f32 %v830, %v954
    %v956 = vpop.f32.mrf.mxu0
    %v957 = vpop.f32.mrf.mxu0
    %v958 = vadd.f32 %v830, %v957
    %v959 = vpop.f32.mrf.mxu0
    %960 = vmatprep.mubr.bf16.mxu0 0
    %961 = vmatmul.mubr.bf16.gmra.mxu0 %v851
    %v962 = vpop.f32.mrf.mxu0
    %v963 = vadd.f32 %v830, %v962
    %v964 = vpop.f32.mrf.mxu0
    %v965 = vpop.f32.mrf.mxu0
    %v966 = vadd.f32 %v830, %v965
    %v967 = vpop.f32.mrf.mxu0
    %968 = vdwg.mxu0
    %v969 = vld [vmem:[#allocation8] sm:$0xf]
    %v970 = vld [vmem:[#allocation8 + $0x4] sm:$0xf]
    %v971 = vld [vmem:[#allocation8 + $0x8] sm:$0xf]
    %v972 = vld [vmem:[#allocation8 + $0xc] sm:$0xf]
    %v973 = vld [vmem:[#allocation8 + $0x10] sm:$0xf]
    %v974 = vld [vmem:[#allocation8 + $0x14] sm:$0xf]
    %v975 = vld [vmem:[#allocation8 + $0x18] sm:$0xf]
    %v976 = vld [vmem:[#allocation8 + $0x1c] sm:$0xf]
    %v977 = vld [vmem:[#allocation8 + $0x20] sm:$0xf]
    %v978 = vld [vmem:[#allocation8 + $0x24] sm:$0xf]
    %v979 = vld [vmem:[#allocation8 + $0x28] sm:$0xf]
    %v980 = vld [vmem:[#allocation8 + $0x2c] sm:$0xf]
    %v981 = vld [vmem:[#allocation8 + $0x30] sm:$0xf]
    %v982 = vld [vmem:[#allocation8 + $0x34] sm:$0xf]
    %v983 = vld [vmem:[#allocation8 + $0x38] sm:$0xf]
    %v984 = vld [vmem:[#allocation8 + $0x3c] sm:$0xf]
    %v985 = vld [vmem:[%s5] sm:$0x1]
    %v986 = vld [vmem:[%s6] sm:$0x1]
    %v987 = vld [vmem:[#allocation13] sm:$0xff]
    %v988 = vld [vmem:[#allocation13 + $0x8] sm:$0xff]
    %v989 = vld [vmem:[#allocation13 + $0x10] sm:$0xff]
    %v990 = vld [vmem:[#allocation13 + $0x18] sm:$0xff]
    %v991 = vld [vmem:[#allocation13 + $0x20] sm:$0xff]
    %v992 = vld [vmem:[#allocation13 + $0x28] sm:$0xff]
    %v993 = vld [vmem:[#allocation13 + $0x30] sm:$0xff]
    %v994 = vld [vmem:[#allocation13 + $0x38] sm:$0xff]
    %v995 = vld [vmem:[#allocation13 + $0x40] sm:$0xff]
    %v996 = vld [vmem:[#allocation13 + $0x48] sm:$0xff]
    %v997 = vld [vmem:[#allocation13 + $0x50] sm:$0xff]
    %v998 = vld [vmem:[#allocation13 + $0x58] sm:$0xff]
    %v999 = vld [vmem:[#allocation13 + $0x60] sm:$0xff]
    %v1000 = vld [vmem:[#allocation13 + $0x68] sm:$0xff]
    %v1001 = vld [vmem:[#allocation13 + $0x70] sm:$0xff]
    %v1002 = vld [vmem:[#allocation13 + $0x78] sm:$0xff]
    %v1003 = vld [vmem:[#allocation13 + $0x80] sm:$0xff]
    %v1004 = vld [vmem:[#allocation13 + $0x88] sm:$0xff]
    %v1005 = vld [vmem:[#allocation13 + $0x90] sm:$0xff]
    %v1006 = vld [vmem:[#allocation13 + $0x98] sm:$0xff]
    %v1007 = vld [vmem:[#allocation13 + $0xa0] sm:$0xff]
    %v1008 = vld [vmem:[#allocation13 + $0xa8] sm:$0xff]
    %v1009 = vld [vmem:[#allocation13 + $0xb0] sm:$0xff]
    %v1010 = vld [vmem:[#allocation13 + $0xb8] sm:$0xff]
    %v1011 = vld [vmem:[#allocation13 + $0xc0] sm:$0xff]
    %v1012 = vld [vmem:[#allocation13 + $0xc8] sm:$0xff]
    %v1013 = vld [vmem:[#allocation13 + $0xd0] sm:$0xff]
    %v1014 = vld [vmem:[#allocation13 + $0xd8] sm:$0xff]
    %v1015 = vld [vmem:[#allocation13 + $0xe0] sm:$0xff]
    %v1016 = vld [vmem:[#allocation13 + $0xe8] sm:$0xff]
    %v1017 = vld [vmem:[#allocation13 + $0xf0] sm:$0xff]
    %v1018 = vld [vmem:[#allocation13 + $0xf8] sm:$0xff]
    %v1019 = vld [vmem:[#allocation14] sm:$0xff]
    %v1020 = vld [vmem:[#allocation14 + $0x8] sm:$0xff]
    %v1021 = vld [vmem:[#allocation14 + $0x10] sm:$0xff]
    %v1022 = vld [vmem:[#allocation14 + $0x18] sm:$0xff]
    %v1023 = vld [vmem:[#allocation14 + $0x20] sm:$0xff]
    %v1024 = vld [vmem:[#allocation14 + $0x28] sm:$0xff]
    %v1025 = vld [vmem:[#allocation14 + $0x30] sm:$0xff]
    %v1026 = vld [vmem:[#allocation14 + $0x38] sm:$0xff]
    %v1027 = vld [vmem:[#allocation14 + $0x40] sm:$0xff]
    %v1028 = vld [vmem:[#allocation14 + $0x48] sm:$0xff]
    %v1029 = vld [vmem:[#allocation14 + $0x50] sm:$0xff]
    %v1030 = vld [vmem:[#allocation14 + $0x58] sm:$0xff]
    %v1031 = vld [vmem:[#allocation14 + $0x60] sm:$0xff]
    %v1032 = vld [vmem:[#allocation14 + $0x68] sm:$0xff]
    %v1033 = vld [vmem:[#allocation14 + $0x70] sm:$0xff]
    %v1034 = vld [vmem:[#allocation14 + $0x78] sm:$0xff]
    %v1035 = vld [vmem:[#allocation14 + $0x80] sm:$0xff]
    %v1036 = vld [vmem:[#allocation14 + $0x88] sm:$0xff]
    %v1037 = vld [vmem:[#allocation14 + $0x90] sm:$0xff]
    %v1038 = vld [vmem:[#allocation14 + $0x98] sm:$0xff]
    %v1039 = vld [vmem:[#allocation14 + $0xa0] sm:$0xff]
    %v1040 = vld [vmem:[#allocation14 + $0xa8] sm:$0xff]
    %v1041 = vld [vmem:[#allocation14 + $0xb0] sm:$0xff]
    %v1042 = vld [vmem:[#allocation14 + $0xb8] sm:$0xff]
    %v1043 = vld [vmem:[#allocation14 + $0xc0] sm:$0xff]
    %v1044 = vld [vmem:[#allocation14 + $0xc8] sm:$0xff]
    %v1045 = vld [vmem:[#allocation14 + $0xd0] sm:$0xff]
    %v1046 = vld [vmem:[#allocation14 + $0xd8] sm:$0xff]
    %v1047 = vld [vmem:[#allocation14 + $0xe0] sm:$0xff]
    %v1048 = vld [vmem:[#allocation14 + $0xe8] sm:$0xff]
    %v1049 = vld [vmem:[#allocation14 + $0xf0] sm:$0xff]
    %v1050 = vld [vmem:[#allocation14 + $0xf8] sm:$0xff]
    %v1051 = vld [vmem:[#allocation16] sm:$0xff]
    %v1052 = vld [vmem:[#allocation16 + $0x8] sm:$0xff]
    %v1053 = vld [vmem:[#allocation16 + $0x10] sm:$0xff]
    %v1054 = vld [vmem:[#allocation16 + $0x18] sm:$0xff]
    %v1055 = vld [vmem:[#allocation16 + $0x20] sm:$0xff]
    %v1056 = vld [vmem:[#allocation16 + $0x28] sm:$0xff]
    %v1057 = vld [vmem:[#allocation16 + $0x30] sm:$0xff]
    %v1058 = vld [vmem:[#allocation16 + $0x38] sm:$0xff]
    %v1059 = vld [vmem:[#allocation16 + $0x40] sm:$0xff]
    %v1060 = vld [vmem:[#allocation16 + $0x48] sm:$0xff]
    %v1061 = vld [vmem:[#allocation16 + $0x50] sm:$0xff]
    %v1062 = vld [vmem:[#allocation16 + $0x58] sm:$0xff]
    %v1063 = vld [vmem:[#allocation16 + $0x60] sm:$0xff]
    %v1064 = vld [vmem:[#allocation16 + $0x68] sm:$0xff]
    %v1065 = vld [vmem:[#allocation16 + $0x70] sm:$0xff]
    %v1066 = vld [vmem:[#allocation16 + $0x78] sm:$0xff]
    %v1067 = vld [vmem:[#allocation16 + $0x80] sm:$0xff]
    %v1068 = vld [vmem:[#allocation16 + $0x88] sm:$0xff]
    %v1069 = vld [vmem:[#allocation16 + $0x90] sm:$0xff]
    %v1070 = vld [vmem:[#allocation16 + $0x98] sm:$0xff]
    %v1071 = vld [vmem:[#allocation16 + $0xa0] sm:$0xff]
    %v1072 = vld [vmem:[#allocation16 + $0xa8] sm:$0xff]
    %v1073 = vld [vmem:[#allocation16 + $0xb0] sm:$0xff]
    %v1074 = vld [vmem:[#allocation16 + $0xb8] sm:$0xff]
    %v1075 = vld [vmem:[#allocation16 + $0xc0] sm:$0xff]
    %v1076 = vld [vmem:[#allocation16 + $0xc8] sm:$0xff]
    %v1077 = vld [vmem:[#allocation16 + $0xd0] sm:$0xff]
    %v1078 = vld [vmem:[#allocation16 + $0xd8] sm:$0xff]
    %v1079 = vld [vmem:[#allocation16 + $0xe0] sm:$0xff]
    %v1080 = vld [vmem:[#allocation16 + $0xe8] sm:$0xff]
    %v1081 = vld [vmem:[#allocation16 + $0xf0] sm:$0xff]
    %v1082 = vld [vmem:[#allocation16 + $0xf8] sm:$0xff]
    %v1083 = vld [vmem:[%s14] sm:$0xf]
    loop: start=0, step=1, limit=8
    $region98: #{tpu_custom_call.1} parent=1 // loop_pre_header
      _
    $region99: #{tpu_custom_call.1} parent=1 // loop_header
      %s1085 = sphi 0, %s1089
      %p1086 = scmp.ge.s32.totalorder %s1085, 8
      %v1090 = vphi %v693, %v2819
      %v1091 = vphi %v804, %v2817
    $region100: #{tpu_custom_call.1} parent=1 // loop_header_branch
      %1088 = sbr.rel (%p1086) target = $region104
    $region101: #{tpu_custom_call.1} parent=1 // loop_body
      %v1092 = vpack.c.bf16 %v1090, %v1090
      %v1094 = vlaneseq
      %v1095 = vshrl.u32 %v1094, 7
      %v1096 = vsub.s32 0, %v1095
      %v1097 = vrot.slane %v985, %v1096
      %v1115 = vunpack.c.l.b16 %v969
      %v1116 = vunpack.c.l.b16 %v970
      %v1117 = vunpack.c.l.b16 %v971
      %v1118 = vunpack.c.l.b16 %v972
      %v1119 = vunpack.c.l.b16 %v973
      %v1120 = vunpack.c.l.b16 %v974
      %v1121 = vunpack.c.l.b16 %v975
      %v1122 = vunpack.c.l.b16 %v976
      %v1123 = vunpack.c.l.b16 %v977
      %v1124 = vunpack.c.l.b16 %v978
      %v1125 = vunpack.c.l.b16 %v979
      %v1126 = vunpack.c.l.b16 %v980
      %v1127 = vunpack.c.l.b16 %v981
      %v1128 = vunpack.c.l.b16 %v982
      %v1129 = vunpack.c.l.b16 %v983
      %v1130 = vunpack.c.l.b16 %v984
      %v1131 = vpack.c.b16 %v1116, %v1115
      %v1132 = vpack.c.b16 %v1118, %v1117
      %v1133 = vpack.c.b16 %v1120, %v1119
      %v1134 = vpack.c.b16 %v1122, %v1121
      %v1135 = vpack.c.b16 %v1124, %v1123
      %v1136 = vpack.c.b16 %v1126, %v1125
      %v1137 = vpack.c.b16 %v1128, %v1127
      %v1138 = vpack.c.b16 %v1130, %v1129
      %1147 = vmatprep.subr.bf16.mxu0 0
      %1148 = vmatpush1.bf16.msra.mxu0 %v1138
      %1149 = vmatprep.subr.bf16.mxu0 0
      %1150 = vmatpush1.bf16.msra.mxu0 %v1137
      %1151 = vmatprep.subr.bf16.mxu0 0
      %1152 = vmatpush1.bf16.msra.mxu0 %v1136
      %1153 = vmatprep.subr.bf16.mxu0 0
      %1154 = vmatpush1.bf16.msra.mxu0 %v1135
      %1155 = vmatprep.subr.bf16.mxu0 0
      %1156 = vmatpush1.bf16.msra.mxu0 %v1134
      %1157 = vmatprep.subr.bf16.mxu0 0
      %1158 = vmatpush1.bf16.msra.mxu0 %v1133
      %1159 = vmatprep.subr.bf16.mxu0 0
      %1160 = vmatpush1.bf16.msra.mxu0 %v1132
      %1161 = vmatprep.subr.bf16.mxu0 0
      %1162 = vmatpush1.bf16.msra.mxu0 %v1131
      %1163 = vmatprep.subr.bf16.mxu0 0
      %1164 = vmatpush2.bf16.msra.mxu0 0
      %1165 = vmatprep.subr.bf16.mxu0 0
      %1166 = vmatpush2.bf16.msra.mxu0 0
      %1167 = vmatprep.subr.bf16.mxu0 0
      %1168 = vmatpush2.bf16.msra.mxu0 0
      %1169 = vmatprep.subr.bf16.mxu0 0
      %1170 = vmatpush2.bf16.msra.mxu0 0
      %1171 = vmatprep.subr.bf16.mxu0 0
      %1172 = vmatpush2.bf16.msra.mxu0 0
      %1173 = vmatprep.subr.bf16.mxu0 0
      %1174 = vmatpush2.bf16.msra.mxu0 0
      %1175 = vmatprep.subr.bf16.mxu0 0
      %1176 = vmatpush2.bf16.msra.mxu0 0
      %1177 = vmatprep.subr.bf16.mxu0 0
      %1178 = vmatpush2.bf16.msra.mxu0 0
      %1179 = vmatprep.mubr.bf16.mxu0 0
      %1180 = vmatmul.mubr.bf16.gmra.mxu0 %v1092
      %v1181 = vpop.f32.mrf.mxu0
      %v1182 = vadd.f32 %v1097, %v1181
      %v1183 = vpop.f32.mrf.mxu0
      %v1184 = vpop.f32.mrf.mxu0
      %v1185 = vpop.f32.mrf.mxu0
      %1186 = vdwg.mxu0
      %v1188 = vcombine.high %v1182, %v1182
      %v1190 = vunpack.c.l.s4 1966171168
      %v1191 = vunpack.c.0.s8 %v1190
      %v1192 = vlaneseq
      %v1193 = vshrl.u32 %v1192, 7
      %v1194 = vsub.s32 %v1191, %v1193
      %v1195 = vrot.slane %v1182, %v1194
      %v1197 = vunpack.c.l.s4 1966171168
      %v1198 = vunpack.c.0.s8 %v1197
      %v1199 = vlaneseq
      %v1200 = vshrl.u32 %v1199, 7
      %v1201 = vsub.s32 %v1198, %v1200
      %v1202 = vrot.slane %v1188, %v1201
      %v1203 = vcombine.high %v1195, %v1195
      %v1204 = vcombine.high %v1202, %v1202
      %v1206 = vunpack.c.l.s4 1966171168
      %v1207 = vunpack.c.0.s8 %v1206
      %v1208 = vlaneseq
      %v1209 = vshrl.u32 %v1208, 7
      %v1210 = vsub.s32 %v1207, %v1209
      %v1211 = vrot.slane %v1195, %v1210
      %v1213 = vunpack.c.l.s4 1966171168
      %v1214 = vunpack.c.0.s8 %v1213
      %v1215 = vlaneseq
      %v1216 = vshrl.u32 %v1215, 7
      %v1217 = vsub.s32 %v1214, %v1216
      %v1218 = vrot.slane %v1202, %v1217
      %v1220 = vunpack.c.l.s4 1966171168
      %v1221 = vunpack.c.0.s8 %v1220
      %v1222 = vlaneseq
      %v1223 = vshrl.u32 %v1222, 7
      %v1224 = vsub.s32 %v1221, %v1223
      %v1225 = vrot.slane %v1203, %v1224
      %v1227 = vunpack.c.l.s4 1966171168
      %v1228 = vunpack.c.0.s8 %v1227
      %v1229 = vlaneseq
      %v1230 = vshrl.u32 %v1229, 7
      %v1231 = vsub.s32 %v1228, %v1230
      %v1232 = vrot.slane %v1204, %v1231
      %v1233 = vcombine.high %v1211, %v1211
      %v1234 = vcombine.high %v1218, %v1218
      %v1235 = vcombine.high %v1225, %v1225
      %v1236 = vcombine.high %v1232, %v1232
      %v1237 = vlaneseq
      %v1238 = vshrl.u32 %v1237, 7
      %v1239 = vsub.s32 0, %v1238
      %v1240 = vrot.slane %v1211, %v1239
      %v1241 = vlaneseq
      %v1242 = vshrl.u32 %v1241, 7
      %v1243 = vsub.s32 0, %v1242
      %v1244 = vrot.slane %v1225, %v1243
      %v1245 = vlaneseq
      %v1246 = vshrl.u32 %v1245, 7
      %v1247 = vsub.s32 0, %v1246
      %v1248 = vrot.slane %v1233, %v1247
      %v1249 = vlaneseq
      %v1250 = vshrl.u32 %v1249, 7
      %v1251 = vsub.s32 0, %v1250
      %v1252 = vrot.slane %v1235, %v1251
      %v1253 = vlaneseq
      %v1254 = vshrl.u32 %v1253, 7
      %v1255 = vsub.s32 0, %v1254
      %v1256 = vrot.slane %v1218, %v1255
      %v1257 = vlaneseq
      %v1258 = vshrl.u32 %v1257, 7
      %v1259 = vsub.s32 0, %v1258
      %v1260 = vrot.slane %v1232, %v1259
      %v1261 = vlaneseq
      %v1262 = vshrl.u32 %v1261, 7
      %v1263 = vsub.s32 0, %v1262
      %v1264 = vrot.slane %v1234, %v1263
      %v1265 = vlaneseq
      %v1266 = vshrl.u32 %v1265, 7
      %v1267 = vsub.s32 0, %v1266
      %v1268 = vrot.slane %v1236, %v1267
      %v1277 = vadd.f32 %v939, %v1240
      %v1278 = vadd.f32 %v942, %v1244
      %v1279 = vadd.f32 %v947, %v1248
      %v1280 = vadd.f32 %v950, %v1252
      %v1281 = vadd.f32 %v955, %v1256
      %v1282 = vadd.f32 %v958, %v1260
      %v1283 = vadd.f32 %v963, %v1264
      %v1284 = vadd.f32 %v966, %v1268
      %v1285 = vmax.f32 %v1277, 0.0
      %v1286 = vmax.f32 %v1278, 0.0
      %v1287 = vmax.f32 %v1279, 0.0
      %v1288 = vmax.f32 %v1280, 0.0
      %v1289 = vmax.f32 %v1281, 0.0
      %v1290 = vmax.f32 %v1282, 0.0
      %v1291 = vmax.f32 %v1283, 0.0
      %v1292 = vmax.f32 %v1284, 0.0
      %v1294 = vlaneseq
      %v1295 = vshrl.u32 %v1294, 7
      %v1296 = vsub.s32 0, %v1295
      %v1297 = vrot.slane %v986, %v1296
      %v1299 = vmul.f32 %v1285, %v1297
      %v1300 = vmul.f32 %v1286, %v1297
      %v1301 = vmul.f32 %v1287, %v1297
      %v1302 = vmul.f32 %v1288, %v1297
      %v1303 = vmul.f32 %v1289, %v1297
      %v1304 = vmul.f32 %v1290, %v1297
      %v1305 = vmul.f32 %v1291, %v1297
      %v1306 = vmul.f32 %v1292, %v1297
      %1307 = vadd.xlane.f32.xlu0 %v1299
      %v1308 = vpop.xlane.xlu0 %1307
      %1309 = vadd.xlane.f32.xlu0 %v1300
      %v1310 = vpop.xlane.xlu0 %1309
      %1311 = vadd.xlane.f32.xlu0 %v1301
      %v1312 = vpop.xlane.xlu0 %1311
      %1313 = vadd.xlane.f32.xlu0 %v1302
      %v1314 = vpop.xlane.xlu0 %1313
      %1315 = vadd.xlane.f32.xlu0 %v1303
      %v1316 = vpop.xlane.xlu0 %1315
      %1317 = vadd.xlane.f32.xlu0 %v1304
      %v1318 = vpop.xlane.xlu0 %1317
      %1319 = vadd.xlane.f32.xlu0 %v1305
      %v1320 = vpop.xlane.xlu0 %1319
      %1321 = vadd.xlane.f32.xlu0 %v1306
      %v1322 = vpop.xlane.xlu0 %1321
      %v1331 = vlaneseq
      %v1332 = vand.u32 %v1331, 127
      %v1333 = vlaneseq
      %v1334 = vshrl.u32 %v1333, 7
      %v1335 = vsub.s32 %v1332, %v1334
      %v1336 = vrot.slane %v1308, %v1335
      %v1337 = vlaneseq
      %v1338 = vshrl.u32 %v1337, 7
      %v1339 = vsub.s32 %v1332, %v1338
      %v1340 = vrot.slane %v1310, %v1339
      %v1341 = vlaneseq
      %v1342 = vshrl.u32 %v1341, 7
      %v1343 = vsub.s32 %v1332, %v1342
      %v1344 = vrot.slane %v1312, %v1343
      %v1345 = vlaneseq
      %v1346 = vshrl.u32 %v1345, 7
      %v1347 = vsub.s32 %v1332, %v1346
      %v1348 = vrot.slane %v1314, %v1347
      %v1349 = vlaneseq
      %v1350 = vshrl.u32 %v1349, 7
      %v1351 = vsub.s32 %v1332, %v1350
      %v1352 = vrot.slane %v1316, %v1351
      %v1353 = vlaneseq
      %v1354 = vshrl.u32 %v1353, 7
      %v1355 = vsub.s32 %v1332, %v1354
      %v1356 = vrot.slane %v1318, %v1355
      %v1357 = vlaneseq
      %v1358 = vshrl.u32 %v1357, 7
      %v1359 = vsub.s32 %v1332, %v1358
      %v1360 = vrot.slane %v1320, %v1359
      %v1361 = vlaneseq
      %v1362 = vshrl.u32 %v1361, 7
      %v1363 = vsub.s32 %v1332, %v1362
      %v1364 = vrot.slane %v1322, %v1363
      %v1365 = vsel %vm588, %v1340, %v1336
      %v1366 = vsel %vm591, %v1344, %v1365
      %v1367 = vsel %vm594, %v1348, %v1366
      %v1368 = vsel %vm597, %v1352, %v1367
      %v1369 = vsel %vm600, %v1356, %v1368
      %v1370 = vsel %vm603, %v1360, %v1369
      %v1371 = vsel %vm606, %v1364, %v1370
      %v1373 = vsel %vm183, %v1371, -inf
      %1374 = vmax.xlane.f32.xlu0 %v1373
      %v1375 = vpop.xlane.xlu0 %1374
      %v1377 = vlaneseq
      %v1378 = vshrl.u32 %v1377, 7
      %v1379 = vsub.s32 0, %v1378
      %v1380 = vrot.slane %v1375, %v1379
      %v1381 = vlaneseq
      %v1382 = vshrl.u32 %v1381, 7
      %v1383 = vsub.s32 1, %v1382
      %v1384 = vrot.slane %v1375, %v1383
      %v1385 = vlaneseq
      %v1386 = vshrl.u32 %v1385, 7
      %v1387 = vsub.s32 2, %v1386
      %v1388 = vrot.slane %v1375, %v1387
      %v1389 = vlaneseq
      %v1390 = vshrl.u32 %v1389, 7
      %v1391 = vsub.s32 3, %v1390
      %v1392 = vrot.slane %v1375, %v1391
      %v1393 = vlaneseq
      %v1394 = vshrl.u32 %v1393, 7
      %v1395 = vsub.s32 4, %v1394
      %v1396 = vrot.slane %v1375, %v1395
      %v1397 = vlaneseq
      %v1398 = vshrl.u32 %v1397, 7
      %v1399 = vsub.s32 5, %v1398
      %v1400 = vrot.slane %v1375, %v1399
      %v1401 = vlaneseq
      %v1402 = vshrl.u32 %v1401, 7
      %v1403 = vsub.s32 6, %v1402
      %v1404 = vrot.slane %v1375, %v1403
      %v1405 = vlaneseq
      %v1406 = vshrl.u32 %v1405, 7
      %v1407 = vsub.s32 7, %v1406
      %v1408 = vrot.slane %v1375, %v1407
      %v1417 = vsub.f32 %v1308, %v1380
      %v1418 = vsub.f32 %v1310, %v1384
      %v1419 = vsub.f32 %v1312, %v1388
      %v1420 = vsub.f32 %v1314, %v1392
      %v1421 = vsub.f32 %v1316, %v1396
      %v1422 = vsub.f32 %v1318, %v1400
      %v1423 = vsub.f32 %v1320, %v1404
      %v1424 = vsub.f32 %v1322, %v1408
      %v1425 = vmul.f32 %v1417, 1.442695
      %v1426 = vpow.pop %v1425
      %v1427 = vmul.f32 %v1418, 1.442695
      %v1428 = vpow.pop %v1427
      %v1429 = vmul.f32 %v1419, 1.442695
      %v1430 = vpow.pop %v1429
      %v1431 = vmul.f32 %v1420, 1.442695
      %v1432 = vpow.pop %v1431
      %v1433 = vmul.f32 %v1421, 1.442695
      %v1434 = vpow.pop %v1433
      %v1435 = vmul.f32 %v1422, 1.442695
      %v1436 = vpow.pop %v1435
      %v1437 = vmul.f32 %v1423, 1.442695
      %v1438 = vpow.pop %v1437
      %v1439 = vmul.f32 %v1424, 1.442695
      %v1440 = vpow.pop %v1439
      %1449 = vset.pattern.permute.xlu0 0
      %1450 = vperm.xlu0 %1449, %v1426
      %v1451 = vpop.permute.xlu0 %1450
      %1452 = vset.pattern.permute.xlu0 0
      %1453 = vperm.xlu0 %1452, %v1428
      %v1454 = vpop.permute.xlu0 %1453
      %1455 = vset.pattern.permute.xlu0 0
      %1456 = vperm.xlu0 %1455, %v1430
      %v1457 = vpop.permute.xlu0 %1456
      %1458 = vset.pattern.permute.xlu0 0
      %1459 = vperm.xlu0 %1458, %v1432
      %v1460 = vpop.permute.xlu0 %1459
      %1461 = vset.pattern.permute.xlu0 0
      %1462 = vperm.xlu0 %1461, %v1434
      %v1463 = vpop.permute.xlu0 %1462
      %1464 = vset.pattern.permute.xlu0 0
      %1465 = vperm.xlu0 %1464, %v1436
      %v1466 = vpop.permute.xlu0 %1465
      %1467 = vset.pattern.permute.xlu0 0
      %1468 = vperm.xlu0 %1467, %v1438
      %v1469 = vpop.permute.xlu0 %1468
      %1470 = vset.pattern.permute.xlu0 0
      %1471 = vperm.xlu0 %1470, %v1440
      %v1472 = vpop.permute.xlu0 %1471
      %v1473 = vlaneseq
      %v1474 = vshrl.u32 %v1473, 7
      %v1475 = vsub.s32 %v1332, %v1474
      %v1476 = vrot.slane %v1451, %v1475
      %v1477 = vlaneseq
      %v1478 = vshrl.u32 %v1477, 7
      %v1479 = vsub.s32 %v1332, %v1478
      %v1480 = vrot.slane %v1454, %v1479
      %v1481 = vlaneseq
      %v1482 = vshrl.u32 %v1481, 7
      %v1483 = vsub.s32 %v1332, %v1482
      %v1484 = vrot.slane %v1457, %v1483
      %v1485 = vlaneseq
      %v1486 = vshrl.u32 %v1485, 7
      %v1487 = vsub.s32 %v1332, %v1486
      %v1488 = vrot.slane %v1460, %v1487
      %v1489 = vlaneseq
      %v1490 = vshrl.u32 %v1489, 7
      %v1491 = vsub.s32 %v1332, %v1490
      %v1492 = vrot.slane %v1463, %v1491
      %v1493 = vlaneseq
      %v1494 = vshrl.u32 %v1493, 7
      %v1495 = vsub.s32 %v1332, %v1494
      %v1496 = vrot.slane %v1466, %v1495
      %v1497 = vlaneseq
      %v1498 = vshrl.u32 %v1497, 7
      %v1499 = vsub.s32 %v1332, %v1498
      %v1500 = vrot.slane %v1469, %v1499
      %v1501 = vlaneseq
      %v1502 = vshrl.u32 %v1501, 7
      %v1503 = vsub.s32 %v1332, %v1502
      %v1504 = vrot.slane %v1472, %v1503
      %v1505 = vsel %vm588, %v1480, %v1476
      %v1506 = vsel %vm591, %v1484, %v1505
      %v1507 = vsel %vm594, %v1488, %v1506
      %v1508 = vsel %vm597, %v1492, %v1507
      %v1509 = vsel %vm600, %v1496, %v1508
      %v1510 = vsel %vm603, %v1500, %v1509
      %v1511 = vsel %vm606, %v1504, %v1510
      %v1513 = vsel %vm183, %v1511, 0.0
      %1514 = vadd.xlane.f32.xlu0 %v1513
      %v1515 = vpop.xlane.xlu0 %1514
      %v1516 = vrcp.pop %v1515
      %v1518 = vlaneseq
      %v1519 = vshrl.u32 %v1518, 7
      %v1520 = vsub.s32 0, %v1519
      %v1521 = vrot.slane %v1516, %v1520
      %v1522 = vlaneseq
      %v1523 = vshrl.u32 %v1522, 7
      %v1524 = vsub.s32 1, %v1523
      %v1525 = vrot.slane %v1516, %v1524
      %v1526 = vlaneseq
      %v1527 = vshrl.u32 %v1526, 7
      %v1528 = vsub.s32 2, %v1527
      %v1529 = vrot.slane %v1516, %v1528
      %v1530 = vlaneseq
      %v1531 = vshrl.u32 %v1530, 7
      %v1532 = vsub.s32 3, %v1531
      %v1533 = vrot.slane %v1516, %v1532
      %v1534 = vlaneseq
      %v1535 = vshrl.u32 %v1534, 7
      %v1536 = vsub.s32 4, %v1535
      %v1537 = vrot.slane %v1516, %v1536
      %v1538 = vlaneseq
      %v1539 = vshrl.u32 %v1538, 7
      %v1540 = vsub.s32 5, %v1539
      %v1541 = vrot.slane %v1516, %v1540
      %v1542 = vlaneseq
      %v1543 = vshrl.u32 %v1542, 7
      %v1544 = vsub.s32 6, %v1543
      %v1545 = vrot.slane %v1516, %v1544
      %v1546 = vlaneseq
      %v1547 = vshrl.u32 %v1546, 7
      %v1548 = vsub.s32 7, %v1547
      %v1549 = vrot.slane %v1516, %v1548
      %v1558 = vmul.f32 %v1426, %v1521
      %v1559 = vmul.f32 %v1428, %v1525
      %v1560 = vmul.f32 %v1430, %v1529
      %v1561 = vmul.f32 %v1432, %v1533
      %v1562 = vmul.f32 %v1434, %v1537
      %v1563 = vmul.f32 %v1436, %v1541
      %v1564 = vmul.f32 %v1438, %v1545
      %v1565 = vmul.f32 %v1440, %v1549
      %v1566 = vpack.c.bf16 %v1558, %v1558
      %v1567 = vpack.c.bf16 %v1559, %v1559
      %v1568 = vpack.c.bf16 %v1560, %v1560
      %v1569 = vpack.c.bf16 %v1561, %v1561
      %v1570 = vpack.c.bf16 %v1562, %v1562
      %v1571 = vpack.c.bf16 %v1563, %v1563
      %v1572 = vpack.c.bf16 %v1564, %v1564
      %v1573 = vpack.c.bf16 %v1565, %v1565
      %v1575 = vunpack.c.l.b16 %v1566
      %1576 = vset.pattern.permute.xlu0 0
      %1577 = vperm.xlu0 %1576, %v1575
      %v1578 = vpop.permute.xlu0 %1577
      %v1579 = vlaneseq
      %v1580 = vshrl.u32 %v1579, 7
      %v1581 = vsub.s32 %v1332, %v1580
      %v1582 = vrot.slane %v1578, %v1581
      %v1583 = vpack.c.b16 %v1582, %v1582
      %v1585 = vsel %vm183, %v1583, 0
      %1587 = vmatprep.subr.bf16.mxu0 0
      %1588 = vmatpush1.bf16.msra.mxu0 0
      %1589 = vmatprep.subr.bf16.mxu0 0
      %1590 = vmatpush1.bf16.msra.mxu0 0
      %1591 = vmatprep.subr.bf16.mxu0 0
      %1592 = vmatpush1.bf16.msra.mxu0 0
      %1593 = vmatprep.subr.bf16.mxu0 0
      %1594 = vmatpush1.bf16.msra.mxu0 0
      %1595 = vmatprep.subr.bf16.mxu0 0
      %1596 = vmatpush1.bf16.msra.mxu0 0
      %1597 = vmatprep.subr.bf16.mxu0 0
      %1598 = vmatpush1.bf16.msra.mxu0 0
      %1599 = vmatprep.subr.bf16.mxu0 0
      %1600 = vmatpush1.bf16.msra.mxu0 0
      %1601 = vmatprep.subr.bf16.mxu0 0
      %1602 = vmatpush1.bf16.msra.mxu0 %v189
      %1603 = vmatprep.subr.bf16.mxu0 0
      %1604 = vmatpush2.bf16.msra.mxu0 0
      %1605 = vmatprep.subr.bf16.mxu0 0
      %1606 = vmatpush2.bf16.msra.mxu0 0
      %1607 = vmatprep.subr.bf16.mxu0 0
      %1608 = vmatpush2.bf16.msra.mxu0 0
      %1609 = vmatprep.subr.bf16.mxu0 0
      %1610 = vmatpush2.bf16.msra.mxu0 0
      %1611 = vmatprep.subr.bf16.mxu0 0
      %1612 = vmatpush2.bf16.msra.mxu0 0
      %1613 = vmatprep.subr.bf16.mxu0 0
      %1614 = vmatpush2.bf16.msra.mxu0 0
      %1615 = vmatprep.subr.bf16.mxu0 0
      %1616 = vmatpush2.bf16.msra.mxu0 0
      %1617 = vmatprep.subr.bf16.mxu0 0
      %1618 = vmatpush2.bf16.msra.mxu0 0
      %1619 = vmatprep.mubr.bf16.mxu0 0
      %1620 = vmatmul.mubr.bf16.gmra.mxu0 %v1585
      %v1621 = vpop.f32.mrf.mxu0
      %v1622 = vadd.f32 0.0, %v1621
      %v1623 = vpop.f32.mrf.mxu0
      %v1624 = vpop.f32.mrf.mxu0
      %v1625 = vpop.f32.mrf.mxu0
      %1626 = vdwg.mxu0
      %v1628 = vunpack.c.l.b16 %v1567
      %1629 = vset.pattern.permute.xlu0 0
      %1630 = vperm.xlu0 %1629, %v1628
      %v1631 = vpop.permute.xlu0 %1630
      %v1632 = vlaneseq
      %v1633 = vshrl.u32 %v1632, 7
      %v1634 = vsub.s32 %v1332, %v1633
      %v1635 = vrot.slane %v1631, %v1634
      %v1636 = vpack.c.b16 %v1635, %v1635
      %v1638 = vsel %vm183, %v1636, 0
      %1640 = vmatprep.subr.bf16.mxu0 0
      %1641 = vmatpush1.bf16.msra.mxu0 0
      %1642 = vmatprep.subr.bf16.mxu0 0
      %1643 = vmatpush1.bf16.msra.mxu0 0
      %1644 = vmatprep.subr.bf16.mxu0 0
      %1645 = vmatpush1.bf16.msra.mxu0 0
      %1646 = vmatprep.subr.bf16.mxu0 0
      %1647 = vmatpush1.bf16.msra.mxu0 0
      %1648 = vmatprep.subr.bf16.mxu0 0
      %1649 = vmatpush1.bf16.msra.mxu0 0
      %1650 = vmatprep.subr.bf16.mxu0 0
      %1651 = vmatpush1.bf16.msra.mxu0 0
      %1652 = vmatprep.subr.bf16.mxu0 0
      %1653 = vmatpush1.bf16.msra.mxu0 0
      %1654 = vmatprep.subr.bf16.mxu0 0
      %1655 = vmatpush1.bf16.msra.mxu0 %v232
      %1656 = vmatprep.subr.bf16.mxu0 0
      %1657 = vmatpush2.bf16.msra.mxu0 0
      %1658 = vmatprep.subr.bf16.mxu0 0
      %1659 = vmatpush2.bf16.msra.mxu0 0
      %1660 = vmatprep.subr.bf16.mxu0 0
      %1661 = vmatpush2.bf16.msra.mxu0 0
      %1662 = vmatprep.subr.bf16.mxu0 0
      %1663 = vmatpush2.bf16.msra.mxu0 0
      %1664 = vmatprep.subr.bf16.mxu0 0
      %1665 = vmatpush2.bf16.msra.mxu0 0
      %1666 = vmatprep.subr.bf16.mxu0 0
      %1667 = vmatpush2.bf16.msra.mxu0 0
      %1668 = vmatprep.subr.bf16.mxu0 0
      %1669 = vmatpush2.bf16.msra.mxu0 0
      %1670 = vmatprep.subr.bf16.mxu0 0
      %1671 = vmatpush2.bf16.msra.mxu0 0
      %1672 = vmatprep.mubr.bf16.mxu0 0
      %1673 = vmatmul.mubr.bf16.gmra.mxu0 %v1638
      %v1674 = vpop.f32.mrf.mxu0
      %v1675 = vadd.f32 0.0, %v1674
      %v1676 = vpop.f32.mrf.mxu0
      %v1677 = vpop.f32.mrf.mxu0
      %v1678 = vpop.f32.mrf.mxu0
      %1679 = vdwg.mxu0
      %v1681 = vunpack.c.l.b16 %v1568
      %1682 = vset.pattern.permute.xlu0 0
      %1683 = vperm.xlu0 %1682, %v1681
      %v1684 = vpop.permute.xlu0 %1683
      %v1685 = vlaneseq
      %v1686 = vshrl.u32 %v1685, 7
      %v1687 = vsub.s32 %v1332, %v1686
      %v1688 = vrot.slane %v1684, %v1687
      %v1689 = vpack.c.b16 %v1688, %v1688
      %v1691 = vsel %vm183, %v1689, 0
      %1693 = vmatprep.subr.bf16.mxu0 0
      %1694 = vmatpush1.bf16.msra.mxu0 0
      %1695 = vmatprep.subr.bf16.mxu0 0
      %1696 = vmatpush1.bf16.msra.mxu0 0
      %1697 = vmatprep.subr.bf16.mxu0 0
      %1698 = vmatpush1.bf16.msra.mxu0 0
      %1699 = vmatprep.subr.bf16.mxu0 0
      %1700 = vmatpush1.bf16.msra.mxu0 0
      %1701 = vmatprep.subr.bf16.mxu0 0
      %1702 = vmatpush1.bf16.msra.mxu0 0
      %1703 = vmatprep.subr.bf16.mxu0 0
      %1704 = vmatpush1.bf16.msra.mxu0 0
      %1705 = vmatprep.subr.bf16.mxu0 0
      %1706 = vmatpush1.bf16.msra.mxu0 0
      %1707 = vmatprep.subr.bf16.mxu0 0
      %1708 = vmatpush1.bf16.msra.mxu0 %v275
      %1709 = vmatprep.subr.bf16.mxu0 0
      %1710 = vmatpush2.bf16.msra.mxu0 0
      %1711 = vmatprep.subr.bf16.mxu0 0
      %1712 = vmatpush2.bf16.msra.mxu0 0
      %1713 = vmatprep.subr.bf16.mxu0 0
      %1714 = vmatpush2.bf16.msra.mxu0 0
      %1715 = vmatprep.subr.bf16.mxu0 0
      %1716 = vmatpush2.bf16.msra.mxu0 0
      %1717 = vmatprep.subr.bf16.mxu0 0
      %1718 = vmatpush2.bf16.msra.mxu0 0
      %1719 = vmatprep.subr.bf16.mxu0 0
      %1720 = vmatpush2.bf16.msra.mxu0 0
      %1721 = vmatprep.subr.bf16.mxu0 0
      %1722 = vmatpush2.bf16.msra.mxu0 0
      %1723 = vmatprep.subr.bf16.mxu0 0
      %1724 = vmatpush2.bf16.msra.mxu0 0
      %1725 = vmatprep.mubr.bf16.mxu0 0
      %1726 = vmatmul.mubr.bf16.gmra.mxu0 %v1691
      %v1727 = vpop.f32.mrf.mxu0
      %v1728 = vadd.f32 0.0, %v1727
      %v1729 = vpop.f32.mrf.mxu0
      %v1730 = vpop.f32.mrf.mxu0
      %v1731 = vpop.f32.mrf.mxu0
      %1732 = vdwg.mxu0
      %v1734 = vunpack.c.l.b16 %v1569
      %1735 = vset.pattern.permute.xlu0 0
      %1736 = vperm.xlu0 %1735, %v1734
      %v1737 = vpop.permute.xlu0 %1736
      %v1738 = vlaneseq
      %v1739 = vshrl.u32 %v1738, 7
      %v1740 = vsub.s32 %v1332, %v1739
      %v1741 = vrot.slane %v1737, %v1740
      %v1742 = vpack.c.b16 %v1741, %v1741
      %v1744 = vsel %vm183, %v1742, 0
      %1746 = vmatprep.subr.bf16.mxu0 0
      %1747 = vmatpush1.bf16.msra.mxu0 0
      %1748 = vmatprep.subr.bf16.mxu0 0
      %1749 = vmatpush1.bf16.msra.mxu0 0
      %1750 = vmatprep.subr.bf16.mxu0 0
      %1751 = vmatpush1.bf16.msra.mxu0 0
      %1752 = vmatprep.subr.bf16.mxu0 0
      %1753 = vmatpush1.bf16.msra.mxu0 0
      %1754 = vmatprep.subr.bf16.mxu0 0
      %1755 = vmatpush1.bf16.msra.mxu0 0
      %1756 = vmatprep.subr.bf16.mxu0 0
      %1757 = vmatpush1.bf16.msra.mxu0 0
      %1758 = vmatprep.subr.bf16.mxu0 0
      %1759 = vmatpush1.bf16.msra.mxu0 0
      %1760 = vmatprep.subr.bf16.mxu0 0
      %1761 = vmatpush1.bf16.msra.mxu0 %v318
      %1762 = vmatprep.subr.bf16.mxu0 0
      %1763 = vmatpush2.bf16.msra.mxu0 0
      %1764 = vmatprep.subr.bf16.mxu0 0
      %1765 = vmatpush2.bf16.msra.mxu0 0
      %1766 = vmatprep.subr.bf16.mxu0 0
      %1767 = vmatpush2.bf16.msra.mxu0 0
      %1768 = vmatprep.subr.bf16.mxu0 0
      %1769 = vmatpush2.bf16.msra.mxu0 0
      %1770 = vmatprep.subr.bf16.mxu0 0
      %1771 = vmatpush2.bf16.msra.mxu0 0
      %1772 = vmatprep.subr.bf16.mxu0 0
      %1773 = vmatpush2.bf16.msra.mxu0 0
      %1774 = vmatprep.subr.bf16.mxu0 0
      %1775 = vmatpush2.bf16.msra.mxu0 0
      %1776 = vmatprep.subr.bf16.mxu0 0
      %1777 = vmatpush2.bf16.msra.mxu0 0
      %1778 = vmatprep.mubr.bf16.mxu0 0
      %1779 = vmatmul.mubr.bf16.gmra.mxu0 %v1744
      %v1780 = vpop.f32.mrf.mxu0
      %v1781 = vadd.f32 0.0, %v1780
      %v1782 = vpop.f32.mrf.mxu0
      %v1783 = vpop.f32.mrf.mxu0
      %v1784 = vpop.f32.mrf.mxu0
      %1785 = vdwg.mxu0
      %v1787 = vunpack.c.l.b16 %v1570
      %1788 = vset.pattern.permute.xlu0 0
      %1789 = vperm.xlu0 %1788, %v1787
      %v1790 = vpop.permute.xlu0 %1789
      %v1791 = vlaneseq
      %v1792 = vshrl.u32 %v1791, 7
      %v1793 = vsub.s32 %v1332, %v1792
      %v1794 = vrot.slane %v1790, %v1793
      %v1795 = vpack.c.b16 %v1794, %v1794
      %v1797 = vsel %vm183, %v1795, 0
      %1799 = vmatprep.subr.bf16.mxu0 0
      %1800 = vmatpush1.bf16.msra.mxu0 0
      %1801 = vmatprep.subr.bf16.mxu0 0
      %1802 = vmatpush1.bf16.msra.mxu0 0
      %1803 = vmatprep.subr.bf16.mxu0 0
      %1804 = vmatpush1.bf16.msra.mxu0 0
      %1805 = vmatprep.subr.bf16.mxu0 0
      %1806 = vmatpush1.bf16.msra.mxu0 0
      %1807 = vmatprep.subr.bf16.mxu0 0
      %1808 = vmatpush1.bf16.msra.mxu0 0
      %1809 = vmatprep.subr.bf16.mxu0 0
      %1810 = vmatpush1.bf16.msra.mxu0 0
      %1811 = vmatprep.subr.bf16.mxu0 0
      %1812 = vmatpush1.bf16.msra.mxu0 0
      %1813 = vmatprep.subr.bf16.mxu0 0
      %1814 = vmatpush1.bf16.msra.mxu0 %v361
      %1815 = vmatprep.subr.bf16.mxu0 0
      %1816 = vmatpush2.bf16.msra.mxu0 0
      %1817 = vmatprep.subr.bf16.mxu0 0
      %1818 = vmatpush2.bf16.msra.mxu0 0
      %1819 = vmatprep.subr.bf16.mxu0 0
      %1820 = vmatpush2.bf16.msra.mxu0 0
      %1821 = vmatprep.subr.bf16.mxu0 0
      %1822 = vmatpush2.bf16.msra.mxu0 0
      %1823 = vmatprep.subr.bf16.mxu0 0
      %1824 = vmatpush2.bf16.msra.mxu0 0
      %1825 = vmatprep.subr.bf16.mxu0 0
      %1826 = vmatpush2.bf16.msra.mxu0 0
      %1827 = vmatprep.subr.bf16.mxu0 0
      %1828 = vmatpush2.bf16.msra.mxu0 0
      %1829 = vmatprep.subr.bf16.mxu0 0
      %1830 = vmatpush2.bf16.msra.mxu0 0
      %1831 = vmatprep.mubr.bf16.mxu0 0
      %1832 = vmatmul.mubr.bf16.gmra.mxu0 %v1797
      %v1833 = vpop.f32.mrf.mxu0
      %v1834 = vadd.f32 0.0, %v1833
      %v1835 = vpop.f32.mrf.mxu0
      %v1836 = vpop.f32.mrf.mxu0
      %v1837 = vpop.f32.mrf.mxu0
      %1838 = vdwg.mxu0
      %v1840 = vunpack.c.l.b16 %v1571
      %1841 = vset.pattern.permute.xlu0 0
      %1842 = vperm.xlu0 %1841, %v1840
      %v1843 = vpop.permute.xlu0 %1842
      %v1844 = vlaneseq
      %v1845 = vshrl.u32 %v1844, 7
      %v1846 = vsub.s32 %v1332, %v1845
      %v1847 = vrot.slane %v1843, %v1846
      %v1848 = vpack.c.b16 %v1847, %v1847
      %v1850 = vsel %vm183, %v1848, 0
      %1852 = vmatprep.subr.bf16.mxu0 0
      %1853 = vmatpush1.bf16.msra.mxu0 0
      %1854 = vmatprep.subr.bf16.mxu0 0
      %1855 = vmatpush1.bf16.msra.mxu0 0
      %1856 = vmatprep.subr.bf16.mxu0 0
      %1857 = vmatpush1.bf16.msra.mxu0 0
      %1858 = vmatprep.subr.bf16.mxu0 0
      %1859 = vmatpush1.bf16.msra.mxu0 0
      %1860 = vmatprep.subr.bf16.mxu0 0
      %1861 = vmatpush1.bf16.msra.mxu0 0
      %1862 = vmatprep.subr.bf16.mxu0 0
      %1863 = vmatpush1.bf16.msra.mxu0 0
      %1864 = vmatprep.subr.bf16.mxu0 0
      %1865 = vmatpush1.bf16.msra.mxu0 0
      %1866 = vmatprep.subr.bf16.mxu0 0
      %1867 = vmatpush1.bf16.msra.mxu0 %v404
      %1868 = vmatprep.subr.bf16.mxu0 0
      %1869 = vmatpush2.bf16.msra.mxu0 0
      %1870 = vmatprep.subr.bf16.mxu0 0
      %1871 = vmatpush2.bf16.msra.mxu0 0
      %1872 = vmatprep.subr.bf16.mxu0 0
      %1873 = vmatpush2.bf16.msra.mxu0 0
      %1874 = vmatprep.subr.bf16.mxu0 0
      %1875 = vmatpush2.bf16.msra.mxu0 0
      %1876 = vmatprep.subr.bf16.mxu0 0
      %1877 = vmatpush2.bf16.msra.mxu0 0
      %1878 = vmatprep.subr.bf16.mxu0 0
      %1879 = vmatpush2.bf16.msra.mxu0 0
      %1880 = vmatprep.subr.bf16.mxu0 0
      %1881 = vmatpush2.bf16.msra.mxu0 0
      %1882 = vmatprep.subr.bf16.mxu0 0
      %1883 = vmatpush2.bf16.msra.mxu0 0
      %1884 = vmatprep.mubr.bf16.mxu0 0
      %1885 = vmatmul.mubr.bf16.gmra.mxu0 %v1850
      %v1886 = vpop.f32.mrf.mxu0
      %v1887 = vadd.f32 0.0, %v1886
      %v1888 = vpop.f32.mrf.mxu0
      %v1889 = vpop.f32.mrf.mxu0
      %v1890 = vpop.f32.mrf.mxu0
      %1891 = vdwg.mxu0
      %v1893 = vunpack.c.l.b16 %v1572
      %1894 = vset.pattern.permute.xlu0 0
      %1895 = vperm.xlu0 %1894, %v1893
      %v1896 = vpop.permute.xlu0 %1895
      %v1897 = vlaneseq
      %v1898 = vshrl.u32 %v1897, 7
      %v1899 = vsub.s32 %v1332, %v1898
      %v1900 = vrot.slane %v1896, %v1899
      %v1901 = vpack.c.b16 %v1900, %v1900
      %v1903 = vsel %vm183, %v1901, 0
      %1905 = vmatprep.subr.bf16.mxu0 0
      %1906 = vmatpush1.bf16.msra.mxu0 0
      %1907 = vmatprep.subr.bf16.mxu0 0
      %1908 = vmatpush1.bf16.msra.mxu0 0
      %1909 = vmatprep.subr.bf16.mxu0 0
      %1910 = vmatpush1.bf16.msra.mxu0 0
      %1911 = vmatprep.subr.bf16.mxu0 0
      %1912 = vmatpush1.bf16.msra.mxu0 0
      %1913 = vmatprep.subr.bf16.mxu0 0
      %1914 = vmatpush1.bf16.msra.mxu0 0
      %1915 = vmatprep.subr.bf16.mxu0 0
      %1916 = vmatpush1.bf16.msra.mxu0 0
      %1917 = vmatprep.subr.bf16.mxu0 0
      %1918 = vmatpush1.bf16.msra.mxu0 0
      %1919 = vmatprep.subr.bf16.mxu0 0
      %1920 = vmatpush1.bf16.msra.mxu0 %v447
      %1921 = vmatprep.subr.bf16.mxu0 0
      %1922 = vmatpush2.bf16.msra.mxu0 0
      %1923 = vmatprep.subr.bf16.mxu0 0
      %1924 = vmatpush2.bf16.msra.mxu0 0
      %1925 = vmatprep.subr.bf16.mxu0 0
      %1926 = vmatpush2.bf16.msra.mxu0 0
      %1927 = vmatprep.subr.bf16.mxu0 0
      %1928 = vmatpush2.bf16.msra.mxu0 0
      %1929 = vmatprep.subr.bf16.mxu0 0
      %1930 = vmatpush2.bf16.msra.mxu0 0
      %1931 = vmatprep.subr.bf16.mxu0 0
      %1932 = vmatpush2.bf16.msra.mxu0 0
      %1933 = vmatprep.subr.bf16.mxu0 0
      %1934 = vmatpush2.bf16.msra.mxu0 0
      %1935 = vmatprep.subr.bf16.mxu0 0
      %1936 = vmatpush2.bf16.msra.mxu0 0
      %1937 = vmatprep.mubr.bf16.mxu0 0
      %1938 = vmatmul.mubr.bf16.gmra.mxu0 %v1903
      %v1939 = vpop.f32.mrf.mxu0
      %v1940 = vadd.f32 0.0, %v1939
      %v1941 = vpop.f32.mrf.mxu0
      %v1942 = vpop.f32.mrf.mxu0
      %v1943 = vpop.f32.mrf.mxu0
      %1944 = vdwg.mxu0
      %v1946 = vunpack.c.l.b16 %v1573
      %1947 = vset.pattern.permute.xlu0 0
      %1948 = vperm.xlu0 %1947, %v1946
      %v1949 = vpop.permute.xlu0 %1948
      %v1950 = vlaneseq
      %v1951 = vshrl.u32 %v1950, 7
      %v1952 = vsub.s32 %v1332, %v1951
      %v1953 = vrot.slane %v1949, %v1952
      %v1954 = vpack.c.b16 %v1953, %v1953
      %v1956 = vsel %vm183, %v1954, 0
      %1958 = vmatprep.subr.bf16.mxu0 0
      %1959 = vmatpush1.bf16.msra.mxu0 0
      %1960 = vmatprep.subr.bf16.mxu0 0
      %1961 = vmatpush1.bf16.msra.mxu0 0
      %1962 = vmatprep.subr.bf16.mxu0 0
      %1963 = vmatpush1.bf16.msra.mxu0 0
      %1964 = vmatprep.subr.bf16.mxu0 0
      %1965 = vmatpush1.bf16.msra.mxu0 0
      %1966 = vmatprep.subr.bf16.mxu0 0
      %1967 = vmatpush1.bf16.msra.mxu0 0
      %1968 = vmatprep.subr.bf16.mxu0 0
      %1969 = vmatpush1.bf16.msra.mxu0 0
      %1970 = vmatprep.subr.bf16.mxu0 0
      %1971 = vmatpush1.bf16.msra.mxu0 0
      %1972 = vmatprep.subr.bf16.mxu0 0
      %1973 = vmatpush1.bf16.msra.mxu0 %v490
      %1974 = vmatprep.subr.bf16.mxu0 0
      %1975 = vmatpush2.bf16.msra.mxu0 0
      %1976 = vmatprep.subr.bf16.mxu0 0
      %1977 = vmatpush2.bf16.msra.mxu0 0
      %1978 = vmatprep.subr.bf16.mxu0 0
      %1979 = vmatpush2.bf16.msra.mxu0 0
      %1980 = vmatprep.subr.bf16.mxu0 0
      %1981 = vmatpush2.bf16.msra.mxu0 0
      %1982 = vmatprep.subr.bf16.mxu0 0
      %1983 = vmatpush2.bf16.msra.mxu0 0
      %1984 = vmatprep.subr.bf16.mxu0 0
      %1985 = vmatpush2.bf16.msra.mxu0 0
      %1986 = vmatprep.subr.bf16.mxu0 0
      %1987 = vmatpush2.bf16.msra.mxu0 0
      %1988 = vmatprep.subr.bf16.mxu0 0
      %1989 = vmatpush2.bf16.msra.mxu0 0
      %1990 = vmatprep.mubr.bf16.mxu0 0
      %1991 = vmatmul.mubr.bf16.gmra.mxu0 %v1956
      %v1992 = vpop.f32.mrf.mxu0
      %v1993 = vadd.f32 0.0, %v1992
      %v1994 = vpop.f32.mrf.mxu0
      %v1995 = vpop.f32.mrf.mxu0
      %v1996 = vpop.f32.mrf.mxu0
      %1997 = vdwg.mxu0
      %s1998 = smul.addr %s1085, 4
      %s1999 = scalar_lea.vmem [#allocation2], %s1998
      %v2000 = vld [vmem:[%s1999] sm:$0xf]
      %v2001 = vpack.c.bf16 %v1622, %v1622
      %v2002 = vpack.c.bf16 %v1675, %v1675
      %v2003 = vpack.c.bf16 %v1728, %v1728
      %v2004 = vpack.c.bf16 %v1781, %v1781
      %v2005 = vpack.c.bf16 %v1834, %v1834
      %v2006 = vpack.c.bf16 %v1887, %v1887
      %v2007 = vpack.c.bf16 %v1940, %v1940
      %v2008 = vpack.c.bf16 %v1993, %v1993
      %v2017 = vunpack.c.l.b16 %v2001
      %v2018 = vunpack.c.l.b16 %v2002
      %v2019 = vunpack.c.l.b16 %v2003
      %v2020 = vunpack.c.l.b16 %v2004
      %v2021 = vunpack.c.l.b16 %v2005
      %v2022 = vunpack.c.l.b16 %v2006
      %v2023 = vunpack.c.l.b16 %v2007
      %v2024 = vunpack.c.l.b16 %v2008
      %v2025 = vrot.slane %v2018, 7
      %v2026 = vsel %vm588, %v2025, %v2017
      %v2027 = vrot.slane %v2019, 6
      %v2028 = vsel %vm591, %v2027, %v2026
      %v2029 = vrot.slane %v2020, 5
      %v2030 = vsel %vm594, %v2029, %v2028
      %v2031 = vrot.slane %v2021, 4
      %v2032 = vsel %vm597, %v2031, %v2030
      %v2033 = vrot.slane %v2022, 3
      %v2034 = vsel %vm600, %v2033, %v2032
      %v2035 = vrot.slane %v2023, 2
      %v2036 = vsel %vm603, %v2035, %v2034
      %v2037 = vrot.slane %v2024, 1
      %v2038 = vsel %vm606, %v2037, %v2036
      %v2039 = vpack.c.b16 %v2038, %v2038
      %v2073 = vunpack.c.l.b16 %v1019
      %v2074 = vunpack.c.h.b16 %v1019
      %v2075 = vunpack.c.l.b16 %v1020
      %v2076 = vunpack.c.h.b16 %v1020
      %v2077 = vunpack.c.l.b16 %v1021
      %v2078 = vunpack.c.h.b16 %v1021
      %v2079 = vunpack.c.l.b16 %v1022
      %v2080 = vunpack.c.h.b16 %v1022
      %v2081 = vunpack.c.l.b16 %v1023
      %v2082 = vunpack.c.h.b16 %v1023
      %v2083 = vunpack.c.l.b16 %v1024
      %v2084 = vunpack.c.h.b16 %v1024
      %v2085 = vunpack.c.l.b16 %v1025
      %v2086 = vunpack.c.h.b16 %v1025
      %v2087 = vunpack.c.l.b16 %v1026
      %v2088 = vunpack.c.h.b16 %v1026
      %v2089 = vunpack.c.l.b16 %v1027
      %v2090 = vunpack.c.h.b16 %v1027
      %v2091 = vunpack.c.l.b16 %v1028
      %v2092 = vunpack.c.h.b16 %v1028
      %v2093 = vunpack.c.l.b16 %v1029
      %v2094 = vunpack.c.h.b16 %v1029
      %v2095 = vunpack.c.l.b16 %v1030
      %v2096 = vunpack.c.h.b16 %v1030
      %v2097 = vunpack.c.l.b16 %v1031
      %v2098 = vunpack.c.h.b16 %v1031
      %v2099 = vunpack.c.l.b16 %v1032
      %v2100 = vunpack.c.h.b16 %v1032
      %v2101 = vunpack.c.l.b16 %v1033
      %v2102 = vunpack.c.h.b16 %v1033
      %v2103 = vunpack.c.l.b16 %v1034
      %v2104 = vunpack.c.h.b16 %v1034
      %v2105 = vunpack.c.l.b16 %v1035
      %v2106 = vunpack.c.h.b16 %v1035
      %v2107 = vunpack.c.l.b16 %v1036
      %v2108 = vunpack.c.h.b16 %v1036
      %v2109 = vunpack.c.l.b16 %v1037
      %v2110 = vunpack.c.h.b16 %v1037
      %v2111 = vunpack.c.l.b16 %v1038
      %v2112 = vunpack.c.h.b16 %v1038
      %v2113 = vunpack.c.l.b16 %v1039
      %v2114 = vunpack.c.h.b16 %v1039
      %v2115 = vunpack.c.l.b16 %v1040
      %v2116 = vunpack.c.h.b16 %v1040
      %v2117 = vunpack.c.l.b16 %v1041
      %v2118 = vunpack.c.h.b16 %v1041
      %v2119 = vunpack.c.l.b16 %v1042
      %v2120 = vunpack.c.h.b16 %v1042
      %v2121 = vunpack.c.l.b16 %v1043
      %v2122 = vunpack.c.h.b16 %v1043
      %v2123 = vunpack.c.l.b16 %v1044
      %v2124 = vunpack.c.h.b16 %v1044
      %v2125 = vunpack.c.l.b16 %v1045
      %v2126 = vunpack.c.h.b16 %v1045
      %v2127 = vunpack.c.l.b16 %v1046
      %v2128 = vunpack.c.h.b16 %v1046
      %v2129 = vunpack.c.l.b16 %v1047
      %v2130 = vunpack.c.h.b16 %v1047
      %v2131 = vunpack.c.l.b16 %v1048
      %v2132 = vunpack.c.h.b16 %v1048
      %v2133 = vunpack.c.l.b16 %v1049
      %v2134 = vunpack.c.h.b16 %v1049
      %v2135 = vunpack.c.l.b16 %v1050
      %v2136 = vunpack.c.h.b16 %v1050
      %v2137 = vpack.c.b16 %v2077, %v2073
      %v2138 = vpack.c.b16 %v2078, %v2074
      %v2139 = vpack.c.b16 %v2079, %v2075
      %v2140 = vpack.c.b16 %v2080, %v2076
      %v2141 = vpack.c.b16 %v2085, %v2081
      %v2142 = vpack.c.b16 %v2086, %v2082
      %v2143 = vpack.c.b16 %v2087, %v2083
      %v2144 = vpack.c.b16 %v2088, %v2084
      %v2145 = vpack.c.b16 %v2093, %v2089
      %v2146 = vpack.c.b16 %v2094, %v2090
      %v2147 = vpack.c.b16 %v2095, %v2091
      %v2148 = vpack.c.b16 %v2096, %v2092
      %v2149 = vpack.c.b16 %v2101, %v2097
      %v2150 = vpack.c.b16 %v2102, %v2098
      %v2151 = vpack.c.b16 %v2103, %v2099
      %v2152 = vpack.c.b16 %v2104, %v2100
      %v2153 = vpack.c.b16 %v2109, %v2105
      %v2154 = vpack.c.b16 %v2110, %v2106
      %v2155 = vpack.c.b16 %v2111, %v2107
      %v2156 = vpack.c.b16 %v2112, %v2108
      %v2157 = vpack.c.b16 %v2117, %v2113
      %v2158 = vpack.c.b16 %v2118, %v2114
      %v2159 = vpack.c.b16 %v2119, %v2115
      %v2160 = vpack.c.b16 %v2120, %v2116
      %v2161 = vpack.c.b16 %v2125, %v2121
      %v2162 = vpack.c.b16 %v2126, %v2122
      %v2163 = vpack.c.b16 %v2127, %v2123
      %v2164 = vpack.c.b16 %v2128, %v2124
      %v2165 = vpack.c.b16 %v2133, %v2129
      %v2166 = vpack.c.b16 %v2134, %v2130
      %v2167 = vpack.c.b16 %v2135, %v2131
      %v2168 = vpack.c.b16 %v2136, %v2132
      %2201 = vmatprep.subr.bf16.mxu0 %v2166
      %2202 = vmatpush1.bf16.msra.mxu0 %v2165
      %2203 = vmatprep.subr.bf16.mxu0 %v2162
      %2204 = vmatpush1.bf16.msra.mxu0 %v2161
      %2205 = vmatprep.subr.bf16.mxu0 %v2158
      %2206 = vmatpush1.bf16.msra.mxu0 %v2157
      %2207 = vmatprep.subr.bf16.mxu0 %v2154
      %2208 = vmatpush1.bf16.msra.mxu0 %v2153
      %2209 = vmatprep.subr.bf16.mxu0 %v2150
      %2210 = vmatpush1.bf16.msra.mxu0 %v2149
      %2211 = vmatprep.subr.bf16.mxu0 %v2146
      %2212 = vmatpush1.bf16.msra.mxu0 %v2145
      %2213 = vmatprep.subr.bf16.mxu0 %v2142
      %2214 = vmatpush1.bf16.msra.mxu0 %v2141
      %2215 = vmatprep.subr.bf16.mxu0 %v2138
      %2216 = vmatpush1.bf16.msra.mxu0 %v2137
      %2217 = vmatprep.subr.bf16.mxu0 0
      %2218 = vmatpush2.bf16.msra.mxu0 0
      %2219 = vmatprep.subr.bf16.mxu0 0
      %2220 = vmatpush2.bf16.msra.mxu0 0
      %2221 = vmatprep.subr.bf16.mxu0 0
      %2222 = vmatpush2.bf16.msra.mxu0 0
      %2223 = vmatprep.subr.bf16.mxu0 0
      %2224 = vmatpush2.bf16.msra.mxu0 0
      %2225 = vmatprep.subr.bf16.mxu0 0
      %2226 = vmatpush2.bf16.msra.mxu0 0
      %2227 = vmatprep.subr.bf16.mxu0 0
      %2228 = vmatpush2.bf16.msra.mxu0 0
      %2229 = vmatprep.subr.bf16.mxu0 0
      %2230 = vmatpush2.bf16.msra.mxu0 0
      %2231 = vmatprep.subr.bf16.mxu0 0
      %2232 = vmatpush2.bf16.msra.mxu0 0
      %2233 = vmatprep.mubr.bf16.mxu0 0
      %2234 = vmatmul.mubr.bf16.gmra.mxu0 %v2039
      %v2235 = vpop.f32.mrf.mxu0
      %v2236 = vadd.f32 0.0, %v2235
      %v2237 = vpop.f32.mrf.mxu0
      %v2238 = vadd.f32 0.0, %v2237
      %v2239 = vpop.f32.mrf.mxu0
      %v2240 = vpop.f32.mrf.mxu0
      %2241 = vdwg.mxu0
      %2242 = vmatprep.subr.bf16.mxu0 %v2168
      %2243 = vmatpush1.bf16.msra.mxu0 %v2167
      %2244 = vmatprep.subr.bf16.mxu0 %v2164
      %2245 = vmatpush1.bf16.msra.mxu0 %v2163
      %2246 = vmatprep.subr.bf16.mxu0 %v2160
      %2247 = vmatpush1.bf16.msra.mxu0 %v2159
      %2248 = vmatprep.subr.bf16.mxu0 %v2156
      %2249 = vmatpush1.bf16.msra.mxu0 %v2155
      %2250 = vmatprep.subr.bf16.mxu0 %v2152
      %2251 = vmatpush1.bf16.msra.mxu0 %v2151
      %2252 = vmatprep.subr.bf16.mxu0 %v2148
      %2253 = vmatpush1.bf16.msra.mxu0 %v2147
      %2254 = vmatprep.subr.bf16.mxu0 %v2144
      %2255 = vmatpush1.bf16.msra.mxu0 %v2143
      %2256 = vmatprep.subr.bf16.mxu0 %v2140
      %2257 = vmatpush1.bf16.msra.mxu0 %v2139
      %2258 = vmatprep.subr.bf16.mxu0 0
      %2259 = vmatpush2.bf16.msra.mxu0 0
      %2260 = vmatprep.subr.bf16.mxu0 0
      %2261 = vmatpush2.bf16.msra.mxu0 0
      %2262 = vmatprep.subr.bf16.mxu0 0
      %2263 = vmatpush2.bf16.msra.mxu0 0
      %2264 = vmatprep.subr.bf16.mxu0 0
      %2265 = vmatpush2.bf16.msra.mxu0 0
      %2266 = vmatprep.subr.bf16.mxu0 0
      %2267 = vmatpush2.bf16.msra.mxu0 0
      %2268 = vmatprep.subr.bf16.mxu0 0
      %2269 = vmatpush2.bf16.msra.mxu0 0
      %2270 = vmatprep.subr.bf16.mxu0 0
      %2271 = vmatpush2.bf16.msra.mxu0 0
      %2272 = vmatprep.subr.bf16.mxu0 0
      %2273 = vmatpush2.bf16.msra.mxu0 0
      %2274 = vmatprep.mubr.bf16.mxu0 0
      %2275 = vmatmul.mubr.bf16.gmra.mxu0 %v2039
      %v2276 = vpop.f32.mrf.mxu0
      %v2277 = vadd.f32 0.0, %v2276
      %v2278 = vpop.f32.mrf.mxu0
      %v2279 = vadd.f32 0.0, %v2278
      %v2280 = vpop.f32.mrf.mxu0
      %v2281 = vpop.f32.mrf.mxu0
      %2282 = vdwg.mxu0
      %v2315 = vunpack.c.l.b16 %v987
      %v2316 = vunpack.c.h.b16 %v987
      %v2317 = vunpack.c.l.b16 %v988
      %v2318 = vunpack.c.h.b16 %v988
      %v2319 = vunpack.c.l.b16 %v989
      %v2320 = vunpack.c.h.b16 %v989
      %v2321 = vunpack.c.l.b16 %v990
      %v2322 = vunpack.c.h.b16 %v990
      %v2323 = vunpack.c.l.b16 %v991
      %v2324 = vunpack.c.h.b16 %v991
      %v2325 = vunpack.c.l.b16 %v992
      %v2326 = vunpack.c.h.b16 %v992
      %v2327 = vunpack.c.l.b16 %v993
      %v2328 = vunpack.c.h.b16 %v993
      %v2329 = vunpack.c.l.b16 %v994
      %v2330 = vunpack.c.h.b16 %v994
      %v2331 = vunpack.c.l.b16 %v995
      %v2332 = vunpack.c.h.b16 %v995
      %v2333 = vunpack.c.l.b16 %v996
      %v2334 = vunpack.c.h.b16 %v996
      %v2335 = vunpack.c.l.b16 %v997
      %v2336 = vunpack.c.h.b16 %v997
      %v2337 = vunpack.c.l.b16 %v998
      %v2338 = vunpack.c.h.b16 %v998
      %v2339 = vunpack.c.l.b16 %v999
      %v2340 = vunpack.c.h.b16 %v999
      %v2341 = vunpack.c.l.b16 %v1000
      %v2342 = vunpack.c.h.b16 %v1000
      %v2343 = vunpack.c.l.b16 %v1001
      %v2344 = vunpack.c.h.b16 %v1001
      %v2345 = vunpack.c.l.b16 %v1002
      %v2346 = vunpack.c.h.b16 %v1002
      %v2347 = vunpack.c.l.b16 %v1003
      %v2348 = vunpack.c.h.b16 %v1003
      %v2349 = vunpack.c.l.b16 %v1004
      %v2350 = vunpack.c.h.b16 %v1004
      %v2351 = vunpack.c.l.b16 %v1005
      %v2352 = vunpack.c.h.b16 %v1005
      %v2353 = vunpack.c.l.b16 %v1006
      %v2354 = vunpack.c.h.b16 %v1006
      %v2355 = vunpack.c.l.b16 %v1007
      %v2356 = vunpack.c.h.b16 %v1007
      %v2357 = vunpack.c.l.b16 %v1008
      %v2358 = vunpack.c.h.b16 %v1008
      %v2359 = vunpack.c.l.b16 %v1009
      %v2360 = vunpack.c.h.b16 %v1009
      %v2361 = vunpack.c.l.b16 %v1010
      %v2362 = vunpack.c.h.b16 %v1010
      %v2363 = vunpack.c.l.b16 %v1011
      %v2364 = vunpack.c.h.b16 %v1011
      %v2365 = vunpack.c.l.b16 %v1012
      %v2366 = vunpack.c.h.b16 %v1012
      %v2367 = vunpack.c.l.b16 %v1013
      %v2368 = vunpack.c.h.b16 %v1013
      %v2369 = vunpack.c.l.b16 %v1014
      %v2370 = vunpack.c.h.b16 %v1014
      %v2371 = vunpack.c.l.b16 %v1015
      %v2372 = vunpack.c.h.b16 %v1015
      %v2373 = vunpack.c.l.b16 %v1016
      %v2374 = vunpack.c.h.b16 %v1016
      %v2375 = vunpack.c.l.b16 %v1017
      %v2376 = vunpack.c.h.b16 %v1017
      %v2377 = vunpack.c.l.b16 %v1018
      %v2378 = vunpack.c.h.b16 %v1018
      %v2379 = vpack.c.b16 %v2319, %v2315
      %v2380 = vpack.c.b16 %v2320, %v2316
      %v2381 = vpack.c.b16 %v2321, %v2317
      %v2382 = vpack.c.b16 %v2322, %v2318
      %v2383 = vpack.c.b16 %v2327, %v2323
      %v2384 = vpack.c.b16 %v2328, %v2324
      %v2385 = vpack.c.b16 %v2329, %v2325
      %v2386 = vpack.c.b16 %v2330, %v2326
      %v2387 = vpack.c.b16 %v2335, %v2331
      %v2388 = vpack.c.b16 %v2336, %v2332
      %v2389 = vpack.c.b16 %v2337, %v2333
      %v2390 = vpack.c.b16 %v2338, %v2334
      %v2391 = vpack.c.b16 %v2343, %v2339
      %v2392 = vpack.c.b16 %v2344, %v2340
      %v2393 = vpack.c.b16 %v2345, %v2341
      %v2394 = vpack.c.b16 %v2346, %v2342
      %v2395 = vpack.c.b16 %v2351, %v2347
      %v2396 = vpack.c.b16 %v2352, %v2348
      %v2397 = vpack.c.b16 %v2353, %v2349
      %v2398 = vpack.c.b16 %v2354, %v2350
      %v2399 = vpack.c.b16 %v2359, %v2355
      %v2400 = vpack.c.b16 %v2360, %v2356
      %v2401 = vpack.c.b16 %v2361, %v2357
      %v2402 = vpack.c.b16 %v2362, %v2358
      %v2403 = vpack.c.b16 %v2367, %v2363
      %v2404 = vpack.c.b16 %v2368, %v2364
      %v2405 = vpack.c.b16 %v2369, %v2365
      %v2406 = vpack.c.b16 %v2370, %v2366
      %v2407 = vpack.c.b16 %v2375, %v2371
      %v2408 = vpack.c.b16 %v2376, %v2372
      %v2409 = vpack.c.b16 %v2377, %v2373
      %v2410 = vpack.c.b16 %v2378, %v2374
      %2443 = vmatprep.subr.bf16.mxu0 %v2408
      %2444 = vmatpush1.bf16.msra.mxu0 %v2407
      %2445 = vmatprep.subr.bf16.mxu0 %v2404
      %2446 = vmatpush1.bf16.msra.mxu0 %v2403
      %2447 = vmatprep.subr.bf16.mxu0 %v2400
      %2448 = vmatpush1.bf16.msra.mxu0 %v2399
      %2449 = vmatprep.subr.bf16.mxu0 %v2396
      %2450 = vmatpush1.bf16.msra.mxu0 %v2395
      %2451 = vmatprep.subr.bf16.mxu0 %v2392
      %2452 = vmatpush1.bf16.msra.mxu0 %v2391
      %2453 = vmatprep.subr.bf16.mxu0 %v2388
      %2454 = vmatpush1.bf16.msra.mxu0 %v2387
      %2455 = vmatprep.subr.bf16.mxu0 %v2384
      %2456 = vmatpush1.bf16.msra.mxu0 %v2383
      %2457 = vmatprep.subr.bf16.mxu0 %v2380
      %2458 = vmatpush1.bf16.msra.mxu0 %v2379
      %2459 = vmatprep.subr.bf16.mxu0 0
      %2460 = vmatpush2.bf16.msra.mxu0 0
      %2461 = vmatprep.subr.bf16.mxu0 0
      %2462 = vmatpush2.bf16.msra.mxu0 0
      %2463 = vmatprep.subr.bf16.mxu0 0
      %2464 = vmatpush2.bf16.msra.mxu0 0
      %2465 = vmatprep.subr.bf16.mxu0 0
      %2466 = vmatpush2.bf16.msra.mxu0 0
      %2467 = vmatprep.subr.bf16.mxu0 0
      %2468 = vmatpush2.bf16.msra.mxu0 0
      %2469 = vmatprep.subr.bf16.mxu0 0
      %2470 = vmatpush2.bf16.msra.mxu0 0
      %2471 = vmatprep.subr.bf16.mxu0 0
      %2472 = vmatpush2.bf16.msra.mxu0 0
      %2473 = vmatprep.subr.bf16.mxu0 0
      %2474 = vmatpush2.bf16.msra.mxu0 0
      %2475 = vmatprep.mubr.bf16.mxu0 0
      %2476 = vmatmul.mubr.bf16.gmra.mxu0 %v2000
      %v2477 = vpop.f32.mrf.mxu0
      %v2478 = vadd.f32 %v2236, %v2477
      %v2479 = vpop.f32.mrf.mxu0
      %v2480 = vadd.f32 %v2238, %v2479
      %v2481 = vpop.f32.mrf.mxu0
      %v2482 = vpop.f32.mrf.mxu0
      %2483 = vdwg.mxu0
      %2484 = vmatprep.subr.bf16.mxu0 %v2410
      %2485 = vmatpush1.bf16.msra.mxu0 %v2409
      %2486 = vmatprep.subr.bf16.mxu0 %v2406
      %2487 = vmatpush1.bf16.msra.mxu0 %v2405
      %2488 = vmatprep.subr.bf16.mxu0 %v2402
      %2489 = vmatpush1.bf16.msra.mxu0 %v2401
      %2490 = vmatprep.subr.bf16.mxu0 %v2398
      %2491 = vmatpush1.bf16.msra.mxu0 %v2397
      %2492 = vmatprep.subr.bf16.mxu0 %v2394
      %2493 = vmatpush1.bf16.msra.mxu0 %v2393
      %2494 = vmatprep.subr.bf16.mxu0 %v2390
      %2495 = vmatpush1.bf16.msra.mxu0 %v2389
      %2496 = vmatprep.subr.bf16.mxu0 %v2386
      %2497 = vmatpush1.bf16.msra.mxu0 %v2385
      %2498 = vmatprep.subr.bf16.mxu0 %v2382
      %2499 = vmatpush1.bf16.msra.mxu0 %v2381
      %2500 = vmatprep.subr.bf16.mxu0 0
      %2501 = vmatpush2.bf16.msra.mxu0 0
      %2502 = vmatprep.subr.bf16.mxu0 0
      %2503 = vmatpush2.bf16.msra.mxu0 0
      %2504 = vmatprep.subr.bf16.mxu0 0
      %2505 = vmatpush2.bf16.msra.mxu0 0
      %2506 = vmatprep.subr.bf16.mxu0 0
      %2507 = vmatpush2.bf16.msra.mxu0 0
      %2508 = vmatprep.subr.bf16.mxu0 0
      %2509 = vmatpush2.bf16.msra.mxu0 0
      %2510 = vmatprep.subr.bf16.mxu0 0
      %2511 = vmatpush2.bf16.msra.mxu0 0
      %2512 = vmatprep.subr.bf16.mxu0 0
      %2513 = vmatpush2.bf16.msra.mxu0 0
      %2514 = vmatprep.subr.bf16.mxu0 0
      %2515 = vmatpush2.bf16.msra.mxu0 0
      %2516 = vmatprep.mubr.bf16.mxu0 0
      %2517 = vmatmul.mubr.bf16.gmra.mxu0 %v2000
      %v2518 = vpop.f32.mrf.mxu0
      %v2519 = vadd.f32 %v2277, %v2518
      %v2520 = vpop.f32.mrf.mxu0
      %v2521 = vadd.f32 %v2279, %v2520
      %v2522 = vpop.f32.mrf.mxu0
      %v2523 = vpop.f32.mrf.mxu0
      %2524 = vdwg.mxu0
      %v2557 = vunpack.c.l.b16 %v1051
      %v2558 = vunpack.c.h.b16 %v1051
      %v2559 = vunpack.c.l.b16 %v1052
      %v2560 = vunpack.c.h.b16 %v1052
      %v2561 = vunpack.c.l.b16 %v1053
      %v2562 = vunpack.c.h.b16 %v1053
      %v2563 = vunpack.c.l.b16 %v1054
      %v2564 = vunpack.c.h.b16 %v1054
      %v2565 = vunpack.c.l.b16 %v1055
      %v2566 = vunpack.c.h.b16 %v1055
      %v2567 = vunpack.c.l.b16 %v1056
      %v2568 = vunpack.c.h.b16 %v1056
      %v2569 = vunpack.c.l.b16 %v1057
      %v2570 = vunpack.c.h.b16 %v1057
      %v2571 = vunpack.c.l.b16 %v1058
      %v2572 = vunpack.c.h.b16 %v1058
      %v2573 = vunpack.c.l.b16 %v1059
      %v2574 = vunpack.c.h.b16 %v1059
      %v2575 = vunpack.c.l.b16 %v1060
      %v2576 = vunpack.c.h.b16 %v1060
      %v2577 = vunpack.c.l.b16 %v1061
      %v2578 = vunpack.c.h.b16 %v1061
      %v2579 = vunpack.c.l.b16 %v1062
      %v2580 = vunpack.c.h.b16 %v1062
      %v2581 = vunpack.c.l.b16 %v1063
      %v2582 = vunpack.c.h.b16 %v1063
      %v2583 = vunpack.c.l.b16 %v1064
      %v2584 = vunpack.c.h.b16 %v1064
      %v2585 = vunpack.c.l.b16 %v1065
      %v2586 = vunpack.c.h.b16 %v1065
      %v2587 = vunpack.c.l.b16 %v1066
      %v2588 = vunpack.c.h.b16 %v1066
      %v2589 = vunpack.c.l.b16 %v1067
      %v2590 = vunpack.c.h.b16 %v1067
      %v2591 = vunpack.c.l.b16 %v1068
      %v2592 = vunpack.c.h.b16 %v1068
      %v2593 = vunpack.c.l.b16 %v1069
      %v2594 = vunpack.c.h.b16 %v1069
      %v2595 = vunpack.c.l.b16 %v1070
      %v2596 = vunpack.c.h.b16 %v1070
      %v2597 = vunpack.c.l.b16 %v1071
      %v2598 = vunpack.c.h.b16 %v1071
      %v2599 = vunpack.c.l.b16 %v1072
      %v2600 = vunpack.c.h.b16 %v1072
      %v2601 = vunpack.c.l.b16 %v1073
      %v2602 = vunpack.c.h.b16 %v1073
      %v2603 = vunpack.c.l.b16 %v1074
      %v2604 = vunpack.c.h.b16 %v1074
      %v2605 = vunpack.c.l.b16 %v1075
      %v2606 = vunpack.c.h.b16 %v1075
      %v2607 = vunpack.c.l.b16 %v1076
      %v2608 = vunpack.c.h.b16 %v1076
      %v2609 = vunpack.c.l.b16 %v1077
      %v2610 = vunpack.c.h.b16 %v1077
      %v2611 = vunpack.c.l.b16 %v1078
      %v2612 = vunpack.c.h.b16 %v1078
      %v2613 = vunpack.c.l.b16 %v1079
      %v2614 = vunpack.c.h.b16 %v1079
      %v2615 = vunpack.c.l.b16 %v1080
      %v2616 = vunpack.c.h.b16 %v1080
      %v2617 = vunpack.c.l.b16 %v1081
      %v2618 = vunpack.c.h.b16 %v1081
      %v2619 = vunpack.c.l.b16 %v1082
      %v2620 = vunpack.c.h.b16 %v1082
      %v2621 = vpack.c.b16 %v2561, %v2557
      %v2622 = vpack.c.b16 %v2562, %v2558
      %v2623 = vpack.c.b16 %v2563, %v2559
      %v2624 = vpack.c.b16 %v2564, %v2560
      %v2625 = vpack.c.b16 %v2569, %v2565
      %v2626 = vpack.c.b16 %v2570, %v2566
      %v2627 = vpack.c.b16 %v2571, %v2567
      %v2628 = vpack.c.b16 %v2572, %v2568
      %v2629 = vpack.c.b16 %v2577, %v2573
      %v2630 = vpack.c.b16 %v2578, %v2574
      %v2631 = vpack.c.b16 %v2579, %v2575
      %v2632 = vpack.c.b16 %v2580, %v2576
      %v2633 = vpack.c.b16 %v2585, %v2581
      %v2634 = vpack.c.b16 %v2586, %v2582
      %v2635 = vpack.c.b16 %v2587, %v2583
      %v2636 = vpack.c.b16 %v2588, %v2584
      %v2637 = vpack.c.b16 %v2593, %v2589
      %v2638 = vpack.c.b16 %v2594, %v2590
      %v2639 = vpack.c.b16 %v2595, %v2591
      %v2640 = vpack.c.b16 %v2596, %v2592
      %v2641 = vpack.c.b16 %v2601, %v2597
      %v2642 = vpack.c.b16 %v2602, %v2598
      %v2643 = vpack.c.b16 %v2603, %v2599
      %v2644 = vpack.c.b16 %v2604, %v2600
      %v2645 = vpack.c.b16 %v2609, %v2605
      %v2646 = vpack.c.b16 %v2610, %v2606
      %v2647 = vpack.c.b16 %v2611, %v2607
      %v2648 = vpack.c.b16 %v2612, %v2608
      %v2649 = vpack.c.b16 %v2617, %v2613
      %v2650 = vpack.c.b16 %v2618, %v2614
      %v2651 = vpack.c.b16 %v2619, %v2615
      %v2652 = vpack.c.b16 %v2620, %v2616
      %2685 = vmatprep.subr.bf16.mxu0 %v2650
      %2686 = vmatpush1.bf16.msra.mxu0 %v2649
      %2687 = vmatprep.subr.bf16.mxu0 %v2646
      %2688 = vmatpush1.bf16.msra.mxu0 %v2645
      %2689 = vmatprep.subr.bf16.mxu0 %v2642
      %2690 = vmatpush1.bf16.msra.mxu0 %v2641
      %2691 = vmatprep.subr.bf16.mxu0 %v2638
      %2692 = vmatpush1.bf16.msra.mxu0 %v2637
      %2693 = vmatprep.subr.bf16.mxu0 %v2634
      %2694 = vmatpush1.bf16.msra.mxu0 %v2633
      %2695 = vmatprep.subr.bf16.mxu0 %v2630
      %2696 = vmatpush1.bf16.msra.mxu0 %v2629
      %2697 = vmatprep.subr.bf16.mxu0 %v2626
      %2698 = vmatpush1.bf16.msra.mxu0 %v2625
      %2699 = vmatprep.subr.bf16.mxu0 %v2622
      %2700 = vmatpush1.bf16.msra.mxu0 %v2621
      %2701 = vmatprep.subr.bf16.mxu0 0
      %2702 = vmatpush2.bf16.msra.mxu0 0
      %2703 = vmatprep.subr.bf16.mxu0 0
      %2704 = vmatpush2.bf16.msra.mxu0 0
      %2705 = vmatprep.subr.bf16.mxu0 0
      %2706 = vmatpush2.bf16.msra.mxu0 0
      %2707 = vmatprep.subr.bf16.mxu0 0
      %2708 = vmatpush2.bf16.msra.mxu0 0
      %2709 = vmatprep.subr.bf16.mxu0 0
      %2710 = vmatpush2.bf16.msra.mxu0 0
      %2711 = vmatprep.subr.bf16.mxu0 0
      %2712 = vmatpush2.bf16.msra.mxu0 0
      %2713 = vmatprep.subr.bf16.mxu0 0
      %2714 = vmatpush2.bf16.msra.mxu0 0
      %2715 = vmatprep.subr.bf16.mxu0 0
      %2716 = vmatpush2.bf16.msra.mxu0 0
      %2717 = vmatprep.mubr.bf16.mxu0 0
      %2718 = vmatmul.mubr.bf16.gmra.mxu0 %v1092
      %v2719 = vpop.f32.mrf.mxu0
      %v2720 = vadd.f32 0.0, %v2719
      %v2721 = vpop.f32.mrf.mxu0
      %v2722 = vadd.f32 0.0, %v2721
      %v2723 = vpop.f32.mrf.mxu0
      %v2724 = vpop.f32.mrf.mxu0
      %2725 = vdwg.mxu0
      %2726 = vmatprep.subr.bf16.mxu0 %v2652
      %2727 = vmatpush1.bf16.msra.mxu0 %v2651
      %2728 = vmatprep.subr.bf16.mxu0 %v2648
      %2729 = vmatpush1.bf16.msra.mxu0 %v2647
      %2730 = vmatprep.subr.bf16.mxu0 %v2644
      %2731 = vmatpush1.bf16.msra.mxu0 %v2643
      %2732 = vmatprep.subr.bf16.mxu0 %v2640
      %2733 = vmatpush1.bf16.msra.mxu0 %v2639
      %2734 = vmatprep.subr.bf16.mxu0 %v2636
      %2735 = vmatpush1.bf16.msra.mxu0 %v2635
      %2736 = vmatprep.subr.bf16.mxu0 %v2632
      %2737 = vmatpush1.bf16.msra.mxu0 %v2631
      %2738 = vmatprep.subr.bf16.mxu0 %v2628
      %2739 = vmatpush1.bf16.msra.mxu0 %v2627
      %2740 = vmatprep.subr.bf16.mxu0 %v2624
      %2741 = vmatpush1.bf16.msra.mxu0 %v2623
      %2742 = vmatprep.subr.bf16.mxu0 0
      %2743 = vmatpush2.bf16.msra.mxu0 0
      %2744 = vmatprep.subr.bf16.mxu0 0
      %2745 = vmatpush2.bf16.msra.mxu0 0
      %2746 = vmatprep.subr.bf16.mxu0 0
      %2747 = vmatpush2.bf16.msra.mxu0 0
      %2748 = vmatprep.subr.bf16.mxu0 0
      %2749 = vmatpush2.bf16.msra.mxu0 0
      %2750 = vmatprep.subr.bf16.mxu0 0
      %2751 = vmatpush2.bf16.msra.mxu0 0
      %2752 = vmatprep.subr.bf16.mxu0 0
      %2753 = vmatpush2.bf16.msra.mxu0 0
      %2754 = vmatprep.subr.bf16.mxu0 0
      %2755 = vmatpush2.bf16.msra.mxu0 0
      %2756 = vmatprep.subr.bf16.mxu0 0
      %2757 = vmatpush2.bf16.msra.mxu0 0
      %2758 = vmatprep.mubr.bf16.mxu0 0
      %2759 = vmatmul.mubr.bf16.gmra.mxu0 %v1092
      %v2760 = vpop.f32.mrf.mxu0
      %v2761 = vadd.f32 0.0, %v2760
      %v2762 = vpop.f32.mrf.mxu0
      %v2763 = vadd.f32 0.0, %v2762
      %v2764 = vpop.f32.mrf.mxu0
      %v2765 = vpop.f32.mrf.mxu0
      %2766 = vdwg.mxu0
      %v2767 = vadd.f32 %v2478, %v2720
      %v2768 = vadd.f32 %v2480, %v2722
      %v2769 = vadd.f32 %v2519, %v2761
      %v2770 = vadd.f32 %v2521, %v2763
      %v2772 = vlaneseq
      %v2773 = vshrl.u32 %v2772, 7
      %v2774 = vsub.s32 0, %v2773
      %v2775 = vrot.slane %v1083, %v2774
      %v2776 = vlaneseq
      %v2777 = vshrl.u32 %v2776, 7
      %v2778 = vsub.s32 1, %v2777
      %v2779 = vrot.slane %v1083, %v2778
      %v2780 = vlaneseq
      %v2781 = vshrl.u32 %v2780, 7
      %v2782 = vsub.s32 2, %v2781
      %v2783 = vrot.slane %v1083, %v2782
      %v2784 = vlaneseq
      %v2785 = vshrl.u32 %v2784, 7
      %v2786 = vsub.s32 3, %v2785
      %v2787 = vrot.slane %v1083, %v2786
      %v2792 = vadd.f32 %v2767, %v2775
      %v2793 = vadd.f32 %v2768, %v2779
      %v2794 = vadd.f32 %v2769, %v2783
      %v2795 = vadd.f32 %v2770, %v2787
      %v2796 = vxor.u32 %v2792, 2147483648
      %v2797 = vmul.f32 %v2796, 1.442695
      %v2798 = vpow.pop %v2797
      %v2799 = vadd.f32 %v2798, 1.0
      %v2800 = vrcp.pop %v2799
      %v2801 = vmul.f32 1.0, %v2800
      %v2802 = vxor.u32 %v2793, 2147483648
      %v2803 = vmul.f32 %v2802, 1.442695
      %v2804 = vpow.pop %v2803
      %v2805 = vadd.f32 %v2804, 1.0
      %v2806 = vrcp.pop %v2805
      %v2807 = vmul.f32 1.0, %v2806
      %v2808 = vtanh.pop %v2794
      %v2809 = vxor.u32 %v2795, 2147483648
      %v2810 = vmul.f32 %v2809, 1.442695
      %v2811 = vpow.pop %v2810
      %v2812 = vadd.f32 %v2811, 1.0
      %v2813 = vrcp.pop %v2812
      %v2814 = vmul.f32 1.0, %v2813
      %v2815 = vmul.f32 %v2807, %v1091
      %v2816 = vmul.f32 %v2801, %v2808
      %v2817 = vadd.f32 %v2815, %v2816
      %v2818 = vtanh.pop %v2817
      %v2819 = vmul.f32 %v2814, %v2818
      %v2820 = vpack.c.bf16 %v2819, %v2819
      %s2821 = smul.addr %s1085, 4
      %s2822 = scalar_lea.vmem [#allocation17], %s2821
      %2823 = vst [vmem:[%s2822] sm:$0xf] %v2820
    $region102: #{tpu_custom_call.1} parent=1 // loop_footer
      %s1089 = sadd.s32 1, %s1085
    $region103: #{tpu_custom_call.1} parent=1 // loop_footer_branch
      %1084 = sbr.rel target = $region99
    $region104: #{tpu_custom_call.1} parent=1 // loop_exit
      _
    // Predicated region
    $region105: #{tpu_custom_call.1} parent=1 // pred_check
      _
    $region106: #{tpu_custom_call.1} parent=1 // pred_check_branch
      %2825 = sbr.rel (0) target = $region108
    $region107: #{tpu_custom_call.1} parent=1 // pred_region
      %s2827 = ssub.s32 512, 512
      %2828 = vsyncadd [#allocation4], %s2827
      %s2829 = sshll.u32 [#allocation17], 4
      %s2830 = int_to_ptr.vmem [resolvable:$true] %s2829
      %2835 = dma.vmem_to_hbm [thread:$0]  %s2830, 512, %s15, [#allocation4], 64, 64, 4
    $region108: #{tpu_custom_call.1} parent=1 // pred_fallthru
      _
    // Predicated region
    $region109: #{tpu_custom_call.1} parent=1 // pred_check
      _
    $region110: #{tpu_custom_call.1} parent=1 // pred_check_branch
      %2837 = sbr.rel (0) target = $region112
    $region111: #{tpu_custom_call.1} parent=1 // pred_region
      %2838 = dma.done [#allocation4], 512
    $region112: #{tpu_custom_call.1} parent=1 // pred_fallthru
      _
    %2839 = vsyncpa [#allocation3], 1
    %2840 = vsyncpa [#allocation6], 1
    %2841 = vsyncpa [#allocation9], 1
    %2842 = vsyncpa [#allocation12], 1
    %2843 = vsyncpa [#allocation15], 1
    %2844 = vsyncpa [#allocation4], 1

</llo_original>
